<compile_context>
chip_gen: v6e
topology: v6e:2x2x1
jax: 0.10.0
libtpu: 0.0.40
codegen_flags: <defaults>
</compile_context>

<pallas_src>
import math
import numpy as np

import jax
import jax.numpy as jnp
from jax.experimental import pallas as pl
from jax.experimental.pallas import tpu as pltpu


# ----------------------------------------------------------------------------
# Fused Pallas kernel
# ----------------------------------------------------------------------------
def _neighborhood_max(act, pool_bias, chunk=8):
    """act: [R, N_in]; pool_bias: [N_out, N_in] (0 for neighbors, -1e30 else).

    Returns [R, N_out] with out[r, m] = max over neighborhood(m) of act[r, :].
    Chunked over N_out so the rank-3 intermediate stays small (<= ~16 vregs)
    instead of blowing the whole register file.
    """
    n_out = pool_bias.shape[0]
    pieces = []
    for m0 in range(0, n_out, chunk):
        m1 = min(m0 + chunk, n_out)
        pb = pool_bias[m0:m1, :]                      # [c, N_in]
        v = act[:, None, :] + pb[None, :, :]          # [R, c, N_in]
        pieces.append(jnp.max(v, axis=-1))            # [R, c]
    if len(pieces) == 1:
        return pieces[0]
    return jnp.concatenate(pieces, axis=-1)           # [R, N_out]


def make_fused_kernel(B, layer_dims, out_dim):
    """Build the fused kernel body.

    layer_dims: list of dicts of static ints {K, F_in, F_out, N_in, N_out}.
    Kernel refs: [x] + [S_l, H_flat_l, pool_bias_l]*n_layers + [W3, bias, out].
    """
    n_layers = len(layer_dims)

    def kernel(*refs):
        x_ref = refs[0]
        w3_ref = refs[1 + 3 * n_layers]
        b_ref = refs[2 + 3 * n_layers]
        o_ref = refs[3 + 3 * n_layers]
        f32 = jnp.float32

        # Batch-folded activations: [B * F, N].
        z = x_ref[...]

        for l, d in enumerate(layer_dims):
            K, F_in = d["K"], d["F_in"]
            S = refs[1 + 3 * l][...]       # [N_in, N_in]
            Hf = refs[2 + 3 * l][...]      # [F_out, K * F_in]
            pb = refs[3 + 3 * l][...]      # [N_out, N_in] additive bias

            # Diffusion taps z @ S^k, batch-folded: one [B*F_in, N] x [N, N]
            # dot per tap instead of B tiny ones.
            taps = [z]
            for _ in range(K - 1):
                taps.append(jnp.dot(taps[-1], S, preferred_element_type=f32))

            # Per batch element: all K taps fused into a single MXU dot,
            # then ReLU.  (B is small and statically unrolled.)
            per_batch = []
            for b in range(B):
                Zb = jnp.concatenate(
                    [t[b * F_in:(b + 1) * F_in, :] for t in taps], axis=0)
                yb = jnp.dot(Hf, Zb, preferred_element_type=f32)  # [F_out, N_in]
                per_batch.append(jnp.maximum(yb, 0.0))
            y = jnp.concatenate(per_batch, axis=0)                # [B*F_out, N_in]

            # Space-time neighborhood max pooling (chunked, additive -inf bias).
            z = _neighborhood_max(y, pb, chunk=8)                 # [B*F_out, N_out]

        # ----- final fully-connected layer on VMEM-resident data -----
        F_last = layer_dims[-1]["F_out"]
        W3 = w3_ref[...]                                          # [out, F_last, N_last]
        rows = []
        for b in range(B):
            feat = z[b * F_last:(b + 1) * F_last, :]              # [F_last, N_last]
            prod = feat[None, :, :] * W3                          # [out, F_last, N_last]
            r = jnp.sum(jnp.sum(prod, axis=-1), axis=-1)          # [out]
            rows.append(r.reshape(1, out_dim))
        o_ref[...] = jnp.concatenate(rows, axis=0) + b_ref[...]   # [B, out]

    return kernel


def parametric_net_forward(x, params):
    """x: [B, F0, N0] (PyTorch [batch, features, nodes] layout) -> [B, out]."""
    B, F0, N0 = x.shape
    layer_dims = params["layer_dims"]
    out_dim = params["fc_w3"].shape[0]

    kernel = make_fused_kernel(B, layer_dims, out_dim)

    args = [x.reshape(B * F0, N0)]                    # batch-folded input
    for lp in params["layers"]:
        args += [lp["S_st"], lp["H_flat"], lp["pool_bias"]]
    args += [params["fc_w3"], params["fc_b_row"]]

    vmem_spec = pl.BlockSpec(memory_space=pltpu.MemorySpace.VMEM)
    return pl.pallas_call(
        kernel,
        out_shape=jax.ShapeDtypeStruct((B, out_dim), jnp.float32),
        in_specs=[vmem_spec] * len(args),
        out_specs=vmem_spec,
    )(*args)


# ----------------------------------------------------------------------------
# Graph / parameter construction (host-side glue, plain numpy / JAX)
# ----------------------------------------------------------------------------
def build_spatial_shift(n):
    # Deterministic symmetric cycle graph, normalized by spectral radius.
    A = np.zeros((n, n), np.float32)
    for i in range(n):
        A[i, (i + 1) % n] = 1.0
        A[(i + 1) % n, i] = 1.0
    return (A / np.abs(np.linalg.eigvalsh(A)).max()).astype(np.float32)


def build_time_shift(T, cyclic, directed):
    A = np.zeros((T, T), np.float32)
    for t in range(T - 1):
        A[t, t + 1] = 1.0
    if cyclic:
        A[T - 1, 0] = 1.0
    if not directed:
        A = A + A.T
    return A.astype(np.float32)


def compute_timesteps_and_ratios(window, ratios):
    # Mirrors ParametricNetWithPooling_OLD.compute_timesteps_per_layer
    timesteps = [window]
    adj_ratios = []
    n = window
    for r in ratios:
        r = r if r <= n else 1
        adj_ratios.append(r)
        n = math.ceil(n / r)
        timesteps.append(n)
    return timesteps, adj_ratios


def build_pool_mask(S_st, na_in, na_out, T_in, T_out, ratio, n_hops):
    N_in = S_st.shape[0]
    A = ((np.abs(S_st) > 0) | np.eye(N_in, dtype=bool)).astype(np.int64)
    reach = np.linalg.matrix_power(A, max(1, n_hops)) > 0
    sel = []
    for j in range(T_out):
        t = min(j * ratio, T_in - 1)
        for s in range(na_out):
            sel.append(t * na_in + s)
    return reach[np.array(sel), :].astype(np.float32)  # [N_out, N_in], 0/1


class Config:
    window = 8
    cyclic_time_graph = False
    time_directed = True
    n_spatial = 16
    n_feat_per_layer = [4, 8, 16]
    n_taps_per_layer = [2, 2]
    n_active_nodes_per_timestep_per_layer = [16, 16, 8]
    time_pooling_ratio_per_layer = [2, 2]
    pool_reach_per_layer = [1, 1]
    output_dim = 4
    batch = 2


def init_params(cfg, key):
    S_spatial = build_spatial_shift(cfg.n_spatial)
    timesteps, adj_ratios = compute_timesteps_and_ratios(
        cfg.window, cfg.time_pooling_ratio_per_layer
    )
    active_nodes_per_layer = [
        cfg.n_active_nodes_per_timestep_per_layer[i] * timesteps[i]
        for i in range(len(timesteps))
    ]

    n_layers = len(cfg.n_taps_per_layer)
    keys = jax.random.split(key, n_layers + 2)

    layers, layer_dims = [], []
    for l in range(n_layers):
        na_in = cfg.n_active_nodes_per_timestep_per_layer[l]
        na_out = cfg.n_active_nodes_per_timestep_per_layer[l + 1]
        T_in, T_out = timesteps[l], timesteps[l + 1]
        F_in, F_out = cfg.n_feat_per_layer[l], cfg.n_feat_per_layer[l + 1]
        K = cfg.n_taps_per_layer[l]
        N_in, N_out = na_in * T_in, na_out * T_out

        S_sp = S_spatial[:na_in, :na_in]
        S_t = build_time_shift(T_in, cfg.cyclic_time_graph, cfg.time_directed)
        a_mix, b_mix = 0.6, 0.4  # TODO(synk): learned scalars in the real filter
        S_st = (
            a_mix * np.kron(np.eye(T_in, dtype=np.float32), S_sp)
            + b_mix * np.kron(S_t, np.eye(na_in, dtype=np.float32))
        ).astype(np.float32)

        H = (
            jax.random.normal(keys[l], (K, F_out, F_in), jnp.float32)
            / math.sqrt(F_in * K)
        )
        # Fused-tap weight: H_flat[g, k*F_in + f] = H[k, g, f]
        H_flat = jnp.transpose(H, (1, 0, 2)).reshape(F_out, K * F_in)

        mask = build_pool_mask(
            S_st, na_in, na_out, T_in, T_out, adj_ratios[l],
            cfg.pool_reach_per_layer[l]
        )
        pool_bias = np.where(mask > 0, 0.0, -1e30).astype(np.float32)

        layers.append(dict(
            S_st=jnp.asarray(S_st), H=H, H_flat=H_flat,
            pool_mask=jnp.asarray(mask), pool_bias=jnp.asarray(pool_bias),
        ))
        layer_dims.append(dict(K=K, F_in=F_in, F_out=F_out,
                               N_in=N_in, N_out=N_out))

    F_last = cfg.n_feat_per_layer[-1]
    N_last = active_nodes_per_layer[-1]
    fc_in = F_last * N_last
    fc_w = (
        jax.random.normal(keys[-2], (cfg.output_dim, fc_in), jnp.float32)
        / math.sqrt(fc_in)
    )
    fc_b = jax.random.normal(keys[-1], (cfg.output_dim,), jnp.float32) * 0.01

    params = dict(
        layers=layers, layer_dims=layer_dims,
        fc_w=fc_w, fc_b=fc_b,
        fc_w3=fc_w.reshape(cfg.output_dim, F_last, N_last),  # [out, F, N]
        fc_b_row=fc_b.reshape(1, cfg.output_dim),
    )
    return params, active_nodes_per_layer


# ----------------------------------------------------------------------------
# Pure-JAX reference (mirrors original torch semantics) for a correctness check
# ----------------------------------------------------------------------------
def forward_ref(x, params):
    hi = jax.lax.Precision.HIGHEST
    for lp, d in zip(params["layers"], params["layer_dims"]):
        S, H, mask = lp["S_st"], lp["H"], lp["pool_mask"]
        K = d["K"]
        zk = x
        y = jnp.zeros((x.shape[0], d["F_out"], d["N_in"]), jnp.float32)
        for k in range(K):
            y = y + jnp.einsum("gf,bfn->bgn", H[k], zk, precision=hi)
            if k < K - 1:
                zk = jnp.einsum("bfn,nm->bfm", zk, S, precision=hi)
        y = jnp.maximum(y, 0.0)
        bias = jnp.where(mask > 0, 0.0, -1e30)                    # [N_out, N_in]
        x = jnp.max(y[:, :, None, :] + bias[None, None, :, :], axis=-1)
    flat = x.reshape(x.shape[0], -1)
    return jnp.dot(flat, params["fc_w"].T, precision=hi) + params["fc_b"][None, :]


if __name__ == "__main__":
    cfg = Config()
    key = jax.random.PRNGKey(0)
    pkey, xkey = jax.random.split(key)
    params, active_nodes = init_params(cfg, pkey)

    B = cfg.batch
    F0 = cfg.n_feat_per_layer[0]
    N0 = active_nodes[0]  # window * active spatial nodes = 8 * 16 = 128
    x = jax.random.normal(xkey, (B, F0, N0), jnp.float32)

    y = parametric_net_forward(x, params)
    y = jax.block_until_ready(y)
    assert y.shape == (B, cfg.output_dim), y.shape
    assert bool(jnp.all(jnp.isfinite(y)))

    # Numerical check against the plain-JAX reference of the original module.
    y_ref = jax.block_until_ready(forward_ref(x, params))
    np.testing.assert_allclose(np.asarray(y), np.asarray(y_ref),
                               rtol=2e-2, atol=2e-2)

    print("KERNEL_OK")
</pallas_src>

<mosaic_0001>
module attributes {stable_mosaic.version = 11 : i64} {
  func.func @kernel(%arg0: memref<8x128xf32, #tpu.memory_space<vmem>>, %arg1: memref<128x128xf32, #tpu.memory_space<vmem>>, %arg2: memref<8x8xf32, #tpu.memory_space<vmem>>, %arg3: memref<64x128xf32, #tpu.memory_space<vmem>>, %arg4: memref<64x64xf32, #tpu.memory_space<vmem>>, %arg5: memref<16x16xf32, #tpu.memory_space<vmem>>, %arg6: memref<16x64xf32, #tpu.memory_space<vmem>>, %arg7: memref<4x16x16xf32, #tpu.memory_space<vmem>>, %arg8: memref<1x4xf32, #tpu.memory_space<vmem>>, %arg9: memref<2x4xf32, #tpu.memory_space<vmem>>) attributes {dimension_semantics = [], scalar_prefetch = 0 : i64, scratch_operands = 0 : i64, tpu.core_type = #tpu.core_type<tc>} {
    %c0 = arith.constant 0 : index
    %c0_0 = arith.constant 0 : index
    %0 = vector.load %arg0[%c0, %c0_0] : memref<8x128xf32, #tpu.memory_space<vmem>>, vector<8x128xf32>
    %c0_1 = arith.constant 0 : index
    %c0_2 = arith.constant 0 : index
    %1 = vector.load %arg1[%c0_1, %c0_2] : memref<128x128xf32, #tpu.memory_space<vmem>>, vector<128x128xf32>
    %c0_3 = arith.constant 0 : index
    %c0_4 = arith.constant 0 : index
    %2 = vector.load %arg2[%c0_3, %c0_4] : memref<8x8xf32, #tpu.memory_space<vmem>>, vector<8x8xf32>
    %c0_5 = arith.constant 0 : index
    %c0_6 = arith.constant 0 : index
    %3 = vector.load %arg3[%c0_5, %c0_6] : memref<64x128xf32, #tpu.memory_space<vmem>>, vector<64x128xf32>
    %cst = arith.constant dense<0.000000e+00> : vector<8x128xf32>
    %4 = tpu.matmul %0, %1, %cst {dimension_numbers = #tpu.dot_dimension_numbers<[1], [0], [0], [1], [0, 0, 1, 1], [], []>} : vector<8x128xf32>, vector<128x128xf32>, vector<8x128xf32> -> vector<8x128xf32>
    %5 = vector.extract_strided_slice %0 {offsets = [0, 0], sizes = [4, 128], strides = [1, 1]} : vector<8x128xf32> to vector<4x128xf32>
    %6 = vector.extract_strided_slice %4 {offsets = [0, 0], sizes = [4, 128], strides = [1, 1]} : vector<8x128xf32> to vector<4x128xf32>
    %7 = tpu.concatenate %5, %6 in 0 : vector<4x128xf32>, vector<4x128xf32> -> vector<8x128xf32>
    %cst_7 = arith.constant dense<0.000000e+00> : vector<8x128xf32>
    %8 = tpu.matmul %2, %7, %cst_7 {dimension_numbers = #tpu.dot_dimension_numbers<[1], [0], [0], [1], [0, 0, 1, 1], [], []>} : vector<8x8xf32>, vector<8x128xf32>, vector<8x128xf32> -> vector<8x128xf32>
    %cst_8 = arith.constant 0.000000e+00 : f32
    %9 = vector.broadcast %cst_8 : f32 to vector<8x128xf32>
    %10 = arith.maximumf %8, %9 : vector<8x128xf32>
    %11 = vector.extract_strided_slice %0 {offsets = [4, 0], sizes = [4, 128], strides = [1, 1]} : vector<8x128xf32> to vector<4x128xf32>
    %12 = vector.extract_strided_slice %4 {offsets = [4, 0], sizes = [4, 128], strides = [1, 1]} : vector<8x128xf32> to vector<4x128xf32>
    %13 = tpu.concatenate %11, %12 in 0 : vector<4x128xf32>, vector<4x128xf32> -> vector<8x128xf32>
    %cst_9 = arith.constant dense<0.000000e+00> : vector<8x128xf32>
    %14 = tpu.matmul %2, %13, %cst_9 {dimension_numbers = #tpu.dot_dimension_numbers<[1], [0], [0], [1], [0, 0, 1, 1], [], []>} : vector<8x8xf32>, vector<8x128xf32>, vector<8x128xf32> -> vector<8x128xf32>
    %cst_10 = arith.constant 0.000000e+00 : f32
    %15 = vector.broadcast %cst_10 : f32 to vector<8x128xf32>
    %16 = arith.maximumf %14, %15 : vector<8x128xf32>
    %17 = tpu.concatenate %10, %16 in 0 : vector<8x128xf32>, vector<8x128xf32> -> vector<16x128xf32>
    %18 = vector.extract_strided_slice %3 {offsets = [0, 0], sizes = [8, 128], strides = [1, 1]} : vector<64x128xf32> to vector<8x128xf32>
    %19 = vector.shape_cast %17 : vector<16x128xf32> to vector<16x1x128xf32>
    %20 = vector.shape_cast %18 : vector<8x128xf32> to vector<1x8x128xf32>
    %21 = vector.broadcast %19 : vector<16x1x128xf32> to vector<16x8x128xf32>
    %22 = vector.broadcast %20 : vector<1x8x128xf32> to vector<16x8x128xf32>
    %23 = arith.addf %21, %22 : vector<16x8x128xf32>
    %cst_11 = arith.constant dense<0xFF800000> : vector<16x8xf32>
    %24 = vector.multi_reduction <maximumf>, %23, %cst_11 [2] : vector<16x8x128xf32> to vector<16x8xf32>
    %25 = vector.extract_strided_slice %3 {offsets = [8, 0], sizes = [8, 128], strides = [1, 1]} : vector<64x128xf32> to vector<8x128xf32>
    %26 = vector.shape_cast %17 : vector<16x128xf32> to vector<16x1x128xf32>
    %27 = vector.shape_cast %25 : vector<8x128xf32> to vector<1x8x128xf32>
    %28 = vector.broadcast %26 : vector<16x1x128xf32> to vector<16x8x128xf32>
    %29 = vector.broadcast %27 : vector<1x8x128xf32> to vector<16x8x128xf32>
    %30 = arith.addf %28, %29 : vector<16x8x128xf32>
    %cst_12 = arith.constant dense<0xFF800000> : vector<16x8xf32>
    %31 = vector.multi_reduction <maximumf>, %30, %cst_12 [2] : vector<16x8x128xf32> to vector<16x8xf32>
    %32 = vector.extract_strided_slice %3 {offsets = [16, 0], sizes = [8, 128], strides = [1, 1]} : vector<64x128xf32> to vector<8x128xf32>
    %33 = vector.shape_cast %17 : vector<16x128xf32> to vector<16x1x128xf32>
    %34 = vector.shape_cast %32 : vector<8x128xf32> to vector<1x8x128xf32>
    %35 = vector.broadcast %33 : vector<16x1x128xf32> to vector<16x8x128xf32>
    %36 = vector.broadcast %34 : vector<1x8x128xf32> to vector<16x8x128xf32>
    %37 = arith.addf %35, %36 : vector<16x8x128xf32>
    %cst_13 = arith.constant dense<0xFF800000> : vector<16x8xf32>
    %38 = vector.multi_reduction <maximumf>, %37, %cst_13 [2] : vector<16x8x128xf32> to vector<16x8xf32>
    %39 = vector.extract_strided_slice %3 {offsets = [24, 0], sizes = [8, 128], strides = [1, 1]} : vector<64x128xf32> to vector<8x128xf32>
    %40 = vector.shape_cast %17 : vector<16x128xf32> to vector<16x1x128xf32>
    %41 = vector.shape_cast %39 : vector<8x128xf32> to vector<1x8x128xf32>
    %42 = vector.broadcast %40 : vector<16x1x128xf32> to vector<16x8x128xf32>
    %43 = vector.broadcast %41 : vector<1x8x128xf32> to vector<16x8x128xf32>
    %44 = arith.addf %42, %43 : vector<16x8x128xf32>
    %cst_14 = arith.constant dense<0xFF800000> : vector<16x8xf32>
    %45 = vector.multi_reduction <maximumf>, %44, %cst_14 [2] : vector<16x8x128xf32> to vector<16x8xf32>
    %46 = vector.extract_strided_slice %3 {offsets = [32, 0], sizes = [8, 128], strides = [1, 1]} : vector<64x128xf32> to vector<8x128xf32>
    %47 = vector.shape_cast %17 : vector<16x128xf32> to vector<16x1x128xf32>
    %48 = vector.shape_cast %46 : vector<8x128xf32> to vector<1x8x128xf32>
    %49 = vector.broadcast %47 : vector<16x1x128xf32> to vector<16x8x128xf32>
    %50 = vector.broadcast %48 : vector<1x8x128xf32> to vector<16x8x128xf32>
    %51 = arith.addf %49, %50 : vector<16x8x128xf32>
    %cst_15 = arith.constant dense<0xFF800000> : vector<16x8xf32>
    %52 = vector.multi_reduction <maximumf>, %51, %cst_15 [2] : vector<16x8x128xf32> to vector<16x8xf32>
    %53 = vector.extract_strided_slice %3 {offsets = [40, 0], sizes = [8, 128], strides = [1, 1]} : vector<64x128xf32> to vector<8x128xf32>
    %54 = vector.shape_cast %17 : vector<16x128xf32> to vector<16x1x128xf32>
    %55 = vector.shape_cast %53 : vector<8x128xf32> to vector<1x8x128xf32>
    %56 = vector.broadcast %54 : vector<16x1x128xf32> to vector<16x8x128xf32>
    %57 = vector.broadcast %55 : vector<1x8x128xf32> to vector<16x8x128xf32>
    %58 = arith.addf %56, %57 : vector<16x8x128xf32>
    %cst_16 = arith.constant dense<0xFF800000> : vector<16x8xf32>
    %59 = vector.multi_reduction <maximumf>, %58, %cst_16 [2] : vector<16x8x128xf32> to vector<16x8xf32>
    %60 = vector.extract_strided_slice %3 {offsets = [48, 0], sizes = [8, 128], strides = [1, 1]} : vector<64x128xf32> to vector<8x128xf32>
    %61 = vector.shape_cast %17 : vector<16x128xf32> to vector<16x1x128xf32>
    %62 = vector.shape_cast %60 : vector<8x128xf32> to vector<1x8x128xf32>
    %63 = vector.broadcast %61 : vector<16x1x128xf32> to vector<16x8x128xf32>
    %64 = vector.broadcast %62 : vector<1x8x128xf32> to vector<16x8x128xf32>
    %65 = arith.addf %63, %64 : vector<16x8x128xf32>
    %cst_17 = arith.constant dense<0xFF800000> : vector<16x8xf32>
    %66 = vector.multi_reduction <maximumf>, %65, %cst_17 [2] : vector<16x8x128xf32> to vector<16x8xf32>
    %67 = vector.extract_strided_slice %3 {offsets = [56, 0], sizes = [8, 128], strides = [1, 1]} : vector<64x128xf32> to vector<8x128xf32>
    %68 = vector.shape_cast %17 : vector<16x128xf32> to vector<16x1x128xf32>
    %69 = vector.shape_cast %67 : vector<8x128xf32> to vector<1x8x128xf32>
    %70 = vector.broadcast %68 : vector<16x1x128xf32> to vector<16x8x128xf32>
    %71 = vector.broadcast %69 : vector<1x8x128xf32> to vector<16x8x128xf32>
    %72 = arith.addf %70, %71 : vector<16x8x128xf32>
    %cst_18 = arith.constant dense<0xFF800000> : vector<16x8xf32>
    %73 = vector.multi_reduction <maximumf>, %72, %cst_18 [2] : vector<16x8x128xf32> to vector<16x8xf32>
    %74 = tpu.concatenate %24, %31, %38, %45, %52, %59, %66, %73 in 1 : vector<16x8xf32>, vector<16x8xf32>, vector<16x8xf32>, vector<16x8xf32>, vector<16x8xf32>, vector<16x8xf32>, vector<16x8xf32>, vector<16x8xf32> -> vector<16x64xf32>
    %c0_19 = arith.constant 0 : index
    %c0_20 = arith.constant 0 : index
    %75 = vector.load %arg4[%c0_19, %c0_20] : memref<64x64xf32, #tpu.memory_space<vmem>>, vector<64x64xf32>
    %c0_21 = arith.constant 0 : index
    %c0_22 = arith.constant 0 : index
    %76 = vector.load %arg5[%c0_21, %c0_22] : memref<16x16xf32, #tpu.memory_space<vmem>>, vector<16x16xf32>
    %c0_23 = arith.constant 0 : index
    %c0_24 = arith.constant 0 : index
    %77 = vector.load %arg6[%c0_23, %c0_24] : memref<16x64xf32, #tpu.memory_space<vmem>>, vector<16x64xf32>
    %cst_25 = arith.constant dense<0.000000e+00> : vector<16x64xf32>
    %78 = tpu.matmul %74, %75, %cst_25 {dimension_numbers = #tpu.dot_dimension_numbers<[1], [0], [0], [1], [0, 0, 1, 1], [], []>} : vector<16x64xf32>, vector<64x64xf32>, vector<16x64xf32> -> vector<16x64xf32>
    %79 = vector.extract_strided_slice %74 {offsets = [0, 0], sizes = [8, 64], strides = [1, 1]} : vector<16x64xf32> to vector<8x64xf32>
    %80 = vector.extract_strided_slice %78 {offsets = [0, 0], sizes = [8, 64], strides = [1, 1]} : vector<16x64xf32> to vector<8x64xf32>
    %81 = tpu.concatenate %79, %80 in 0 : vector<8x64xf32>, vector<8x64xf32> -> vector<16x64xf32>
    %cst_26 = arith.constant dense<0.000000e+00> : vector<16x64xf32>
    %82 = tpu.matmul %76, %81, %cst_26 {dimension_numbers = #tpu.dot_dimension_numbers<[1], [0], [0], [1], [0, 0, 1, 1], [], []>} : vector<16x16xf32>, vector<16x64xf32>, vector<16x64xf32> -> vector<16x64xf32>
    %cst_27 = arith.constant 0.000000e+00 : f32
    %83 = vector.broadcast %cst_27 : f32 to vector<16x64xf32>
    %84 = arith.maximumf %82, %83 : vector<16x64xf32>
    %85 = vector.extract_strided_slice %74 {offsets = [8, 0], sizes = [8, 64], strides = [1, 1]} : vector<16x64xf32> to vector<8x64xf32>
    %86 = vector.extract_strided_slice %78 {offsets = [8, 0], sizes = [8, 64], strides = [1, 1]} : vector<16x64xf32> to vector<8x64xf32>
    %87 = tpu.concatenate %85, %86 in 0 : vector<8x64xf32>, vector<8x64xf32> -> vector<16x64xf32>
    %cst_28 = arith.constant dense<0.000000e+00> : vector<16x64xf32>
    %88 = tpu.matmul %76, %87, %cst_28 {dimension_numbers = #tpu.dot_dimension_numbers<[1], [0], [0], [1], [0, 0, 1, 1], [], []>} : vector<16x16xf32>, vector<16x64xf32>, vector<16x64xf32> -> vector<16x64xf32>
    %cst_29 = arith.constant 0.000000e+00 : f32
    %89 = vector.broadcast %cst_29 : f32 to vector<16x64xf32>
    %90 = arith.maximumf %88, %89 : vector<16x64xf32>
    %91 = tpu.concatenate %84, %90 in 0 : vector<16x64xf32>, vector<16x64xf32> -> vector<32x64xf32>
    %92 = vector.extract_strided_slice %77 {offsets = [0, 0], sizes = [8, 64], strides = [1, 1]} : vector<16x64xf32> to vector<8x64xf32>
    %93 = vector.shape_cast %91 : vector<32x64xf32> to vector<32x1x64xf32>
    %94 = vector.shape_cast %92 : vector<8x64xf32> to vector<1x8x64xf32>
    %95 = vector.broadcast %93 : vector<32x1x64xf32> to vector<32x8x64xf32>
    %96 = vector.broadcast %94 : vector<1x8x64xf32> to vector<32x8x64xf32>
    %97 = arith.addf %95, %96 : vector<32x8x64xf32>
    %cst_30 = arith.constant dense<0xFF800000> : vector<32x8xf32>
    %98 = vector.multi_reduction <maximumf>, %97, %cst_30 [2] : vector<32x8x64xf32> to vector<32x8xf32>
    %99 = vector.extract_strided_slice %77 {offsets = [8, 0], sizes = [8, 64], strides = [1, 1]} : vector<16x64xf32> to vector<8x64xf32>
    %100 = vector.shape_cast %91 : vector<32x64xf32> to vector<32x1x64xf32>
    %101 = vector.shape_cast %99 : vector<8x64xf32> to vector<1x8x64xf32>
    %102 = vector.broadcast %100 : vector<32x1x64xf32> to vector<32x8x64xf32>
    %103 = vector.broadcast %101 : vector<1x8x64xf32> to vector<32x8x64xf32>
    %104 = arith.addf %102, %103 : vector<32x8x64xf32>
    %cst_31 = arith.constant dense<0xFF800000> : vector<32x8xf32>
    %105 = vector.multi_reduction <maximumf>, %104, %cst_31 [2] : vector<32x8x64xf32> to vector<32x8xf32>
    %106 = tpu.concatenate %98, %105 in 1 : vector<32x8xf32>, vector<32x8xf32> -> vector<32x16xf32>
    %c0_32 = arith.constant 0 : index
    %c0_33 = arith.constant 0 : index
    %c0_34 = arith.constant 0 : index
    %107 = vector.load %arg7[%c0_32, %c0_33, %c0_34] : memref<4x16x16xf32, #tpu.memory_space<vmem>>, vector<4x16x16xf32>
    %108 = vector.extract_strided_slice %106 {offsets = [0, 0], sizes = [16, 16], strides = [1, 1]} : vector<32x16xf32> to vector<16x16xf32>
    %109 = vector.shape_cast %108 : vector<16x16xf32> to vector<1x16x16xf32>
    %110 = vector.broadcast %109 : vector<1x16x16xf32> to vector<4x16x16xf32>
    %111 = arith.mulf %110, %107 : vector<4x16x16xf32>
    %cst_35 = arith.constant dense<0.000000e+00> : vector<4x16xf32>
    %112 = vector.multi_reduction <add>, %111, %cst_35 [2] : vector<4x16x16xf32> to vector<4x16xf32>
    %cst_36 = arith.constant dense<0.000000e+00> : vector<4xf32>
    %113 = vector.multi_reduction <add>, %112, %cst_36 [1] : vector<4x16xf32> to vector<4xf32>
    %114 = vector.shape_cast %113 : vector<4xf32> to vector<1x4xf32>
    %115 = vector.extract_strided_slice %106 {offsets = [16, 0], sizes = [16, 16], strides = [1, 1]} : vector<32x16xf32> to vector<16x16xf32>
    %116 = vector.shape_cast %115 : vector<16x16xf32> to vector<1x16x16xf32>
    %117 = vector.broadcast %116 : vector<1x16x16xf32> to vector<4x16x16xf32>
    %118 = arith.mulf %117, %107 : vector<4x16x16xf32>
    %cst_37 = arith.constant dense<0.000000e+00> : vector<4x16xf32>
    %119 = vector.multi_reduction <add>, %118, %cst_37 [2] : vector<4x16x16xf32> to vector<4x16xf32>
    %cst_38 = arith.constant dense<0.000000e+00> : vector<4xf32>
    %120 = vector.multi_reduction <add>, %119, %cst_38 [1] : vector<4x16xf32> to vector<4xf32>
    %121 = vector.shape_cast %120 : vector<4xf32> to vector<1x4xf32>
    %122 = tpu.concatenate %114, %121 in 0 : vector<1x4xf32>, vector<1x4xf32> -> vector<2x4xf32>
    %c0_39 = arith.constant 0 : index
    %c0_40 = arith.constant 0 : index
    %123 = vector.load %arg8[%c0_39, %c0_40] : memref<1x4xf32, #tpu.memory_space<vmem>>, vector<1x4xf32>
    %124 = vector.broadcast %123 : vector<1x4xf32> to vector<2x4xf32>
    %125 = arith.addf %122, %124 : vector<2x4xf32>
    %c0_41 = arith.constant 0 : index
    %c0_42 = arith.constant 0 : index
    %126 = vector.load %arg9[%c0_41, %c0_42] : memref<2x4xf32, #tpu.memory_space<vmem>>, vector<2x4xf32>
    tpu.vector_store %arg9[%c0_41, %c0_42], %125 {strides = array<i32>} : memref<2x4xf32, #tpu.memory_space<vmem>>, vector<2x4xf32>,
    return
  }
}

</mosaic_0001>

<llo_original>
// kernel: tpu_custom_call.1
$region0: #{tpu_custom_call.1}
  #allocation0 [shape = 'u32[]', space=smem, size = 0x4, offset = 0x4, fixed_abs, tag = 'smem constant byte address 0x4 - core index']
  #allocation1 [shape = 'u32[144,128]{1,0:T(1,128)}', space=vmem, size = 0x12000, scoped, tag = 'internal scratch']
  %s0 = inlined_call_operand.hbm [shape: f32[8,128], index: 0, kind: input, shape index: {}]
  %s1 = inlined_call_operand.hbm [shape: f32[128,128], index: 1, kind: input, shape index: {}]
  %s2 = inlined_call_operand.hbm [shape: f32[8,8], index: 2, kind: input, shape index: {}]
  %s3 = inlined_call_operand.hbm [shape: f32[64,128], index: 3, kind: input, shape index: {}]
  %s4 = inlined_call_operand.hbm [shape: f32[64,64], index: 4, kind: input, shape index: {}]
  %s5 = inlined_call_operand.hbm [shape: f32[16,16], index: 5, kind: input, shape index: {}]
  %s6 = inlined_call_operand.hbm [shape: f32[16,64], index: 6, kind: input, shape index: {}]
  %s7 = inlined_call_operand.hbm [shape: f32[4,16,16], index: 7, kind: input, shape index: {}]
  %s8 = inlined_call_operand.vmem [shape: f32[1,4], index: 8, kind: input, shape index: {}]
  %s9 = inlined_call_operand.hbm [shape: f32[2,4], index: 9, kind: output, shape index: {}]
  %s10 = sld [smem:[#allocation0]]
  $region78: #{tpu_custom_call.1} parent=0
    _
  %s12 = ssub.s32 1, %s10
  %s13 = scalar_select 0, %s12, %s10
  $region1: #{tpu_custom_call.1} parent=0
    #allocation2 [shape = 'u8[4096]{0}', space=vmem, size = 0x1000, scoped, tag = 'input window, operand 0, single buffered']
    #allocation3 [shape = 's32[1]{0}', space=sflag, size = 0x4, scoped, tag = 'scoped memory for tpu_custom_call.1']
    #allocation4 [shape = 's32[1]{0}', space=sflag, size = 0x4, scoped, tag = 'scoped memory for tpu_custom_call.1']
    #allocation5 [shape = 'u8[65536]{0}', space=vmem, size = 0x10000, scoped, tag = 'input window, operand 1, single buffered']
    #allocation6 [shape = 's32[1]{0}', space=sflag, size = 0x4, scoped, tag = 'scoped memory for tpu_custom_call.1']
    #allocation7 [shape = 'u8[4096]{0}', space=vmem, size = 0x1000, scoped, tag = 'input window, operand 2, single buffered']
    #allocation8 [shape = 'u8[32768]{0}', space=vmem, size = 0x8000, scoped, tag = 'input window, operand 3, single buffered']
    #allocation9 [shape = 's32[1]{0}', space=sflag, size = 0x4, scoped, tag = 'scoped memory for tpu_custom_call.1']
    #allocation10 [shape = 'u8[32768]{0}', space=vmem, size = 0x8000, scoped, tag = 'input window, operand 4, single buffered']
    #allocation11 [shape = 'u8[8192]{0}', space=vmem, size = 0x2000, scoped, tag = 'input window, operand 5, single buffered']
    #allocation12 [shape = 's32[1]{0}', space=sflag, size = 0x4, scoped, tag = 'scoped memory for tpu_custom_call.1']
    #allocation13 [shape = 'u8[8192]{0}', space=vmem, size = 0x2000, scoped, tag = 'input window, operand 6, single buffered']
    #allocation14 [shape = 'u8[32768]{0}', space=vmem, size = 0x8000, scoped, tag = 'input window, operand 7, single buffered']
    #allocation15 [shape = 's32[1]{0}', space=sflag, size = 0x4, scoped, tag = 'scoped memory for tpu_custom_call.1']
    #allocation16 [shape = 'u8[1024]{0}', space=vmem, size = 0x400, scoped, tag = 'output window, operand 0, single buffered']
    %14 = vsyncpa [#allocation3], 0
    %15 = vsyncpa [#allocation6], 0
    %16 = vsyncpa [#allocation9], 0
    %17 = vsyncpa [#allocation12], 0
    %18 = vsyncpa [#allocation15], 0
    %19 = vsyncpa [#allocation4], 0
    // Predicated region
    $region2: #{tpu_custom_call.1} parent=1 // pred_check
      _
    $region3: #{tpu_custom_call.1} parent=1 // pred_check_branch
      %21 = sbr.rel (0) target = $region5
    $region4: #{tpu_custom_call.1} parent=1 // pred_region
      %s23 = ssub.s32 128, 128
      %24 = vsyncadd [#allocation3], %s23
      %s26 = sshll.u32 [#allocation2], 4
      %s27 = int_to_ptr.vmem [resolvable:$true] %s26
      %29 = dma.hbm_to_vmem [thread:$0]  %s0, 128, %s27, [#allocation3]
    $region5: #{tpu_custom_call.1} parent=1 // pred_fallthru
      _
    // Predicated region
    $region6: #{tpu_custom_call.1} parent=1 // pred_check
      _
    $region7: #{tpu_custom_call.1} parent=1 // pred_check_branch
      %31 = sbr.rel (0) target = $region9
    $region8: #{tpu_custom_call.1} parent=1 // pred_region
      %s33 = ssub.s32 2048, 2048
      %34 = vsyncadd [#allocation6], %s33
      %s35 = sshll.u32 [#allocation5], 4
      %s36 = int_to_ptr.vmem [resolvable:$true] %s35
      %41 = dma.hbm_to_vmem [thread:$0]  %s1, 2048, %s36, [#allocation6], 128, 128, 8
    $region9: #{tpu_custom_call.1} parent=1 // pred_fallthru
      _
    // Predicated region
    $region10: #{tpu_custom_call.1} parent=1 // pred_check
      _
    $region11: #{tpu_custom_call.1} parent=1 // pred_check_branch
      %43 = sbr.rel (0) target = $region13
    $region12: #{tpu_custom_call.1} parent=1 // pred_region
      %s45 = ssub.s32 128, 128
      %46 = vsyncadd [#allocation6], %s45
      %s48 = sshll.u32 [#allocation7], 4
      %s49 = int_to_ptr.vmem [resolvable:$true] %s48
      %51 = dma.hbm_to_vmem [thread:$0]  %s2, 128, %s49, [#allocation6]
    $region13: #{tpu_custom_call.1} parent=1 // pred_fallthru
      _
    // Predicated region
    $region14: #{tpu_custom_call.1} parent=1 // pred_check
      _
    $region15: #{tpu_custom_call.1} parent=1 // pred_check_branch
      %53 = sbr.rel (0) target = $region17
    $region16: #{tpu_custom_call.1} parent=1 // pred_region
      %s55 = ssub.s32 1024, 1024
      %56 = vsyncadd [#allocation9], %s55
      %s57 = sshll.u32 [#allocation8], 4
      %s58 = int_to_ptr.vmem [resolvable:$true] %s57
      %63 = dma.hbm_to_vmem [thread:$0]  %s3, 1024, %s58, [#allocation9], 128, 128, 8
    $region17: #{tpu_custom_call.1} parent=1 // pred_fallthru
      _
    // Predicated region
    $region18: #{tpu_custom_call.1} parent=1 // pred_check
      _
    $region19: #{tpu_custom_call.1} parent=1 // pred_check_branch
      %65 = sbr.rel (0) target = $region21
    $region20: #{tpu_custom_call.1} parent=1 // pred_region
      %s67 = ssub.s32 1024, 1024
      %68 = vsyncadd [#allocation9], %s67
      %s69 = sshll.u32 [#allocation10], 4
      %s70 = int_to_ptr.vmem [resolvable:$true] %s69
      %75 = dma.hbm_to_vmem [thread:$0]  %s4, 1024, %s70, [#allocation9], 128, 128, 8
    $region21: #{tpu_custom_call.1} parent=1 // pred_fallthru
      _
    // Predicated region
    $region22: #{tpu_custom_call.1} parent=1 // pred_check
      _
    $region23: #{tpu_custom_call.1} parent=1 // pred_check_branch
      %77 = sbr.rel (0) target = $region25
    $region24: #{tpu_custom_call.1} parent=1 // pred_region
      %s79 = ssub.s32 256, 256
      %80 = vsyncadd [#allocation12], %s79
      %s81 = sshll.u32 [#allocation11], 4
      %s82 = int_to_ptr.vmem [resolvable:$true] %s81
      %87 = dma.hbm_to_vmem [thread:$0]  %s5, 256, %s82, [#allocation12], 128, 128, 8
    $region25: #{tpu_custom_call.1} parent=1 // pred_fallthru
      _
    // Predicated region
    $region26: #{tpu_custom_call.1} parent=1 // pred_check
      _
    $region27: #{tpu_custom_call.1} parent=1 // pred_check_branch
      %89 = sbr.rel (0) target = $region29
    $region28: #{tpu_custom_call.1} parent=1 // pred_region
      %s91 = ssub.s32 256, 256
      %92 = vsyncadd [#allocation12], %s91
      %s93 = sshll.u32 [#allocation13], 4
      %s94 = int_to_ptr.vmem [resolvable:$true] %s93
      %99 = dma.hbm_to_vmem [thread:$0]  %s6, 256, %s94, [#allocation12], 128, 128, 8
    $region29: #{tpu_custom_call.1} parent=1 // pred_fallthru
      _
    // Predicated region
    $region30: #{tpu_custom_call.1} parent=1 // pred_check
      _
    $region31: #{tpu_custom_call.1} parent=1 // pred_check_branch
      %101 = sbr.rel (0) target = $region33
    $region32: #{tpu_custom_call.1} parent=1 // pred_region
      %s103 = ssub.s32 1024, 1024
      %104 = vsyncadd [#allocation15], %s103
      %s105 = sshll.u32 [#allocation14], 4
      %s106 = int_to_ptr.vmem [resolvable:$true] %s105
      %111 = dma.hbm_to_vmem [thread:$0]  %s7, 1024, %s106, [#allocation15], 128, 128, 8
    $region33: #{tpu_custom_call.1} parent=1 // pred_fallthru
      _
    // Predicated region
    $region34: #{tpu_custom_call.1} parent=1 // pred_check
      _
    $region35: #{tpu_custom_call.1} parent=1 // pred_check_branch
      %113 = sbr.rel (0) target = $region37
    $region36: #{tpu_custom_call.1} parent=1 // pred_region
      _
    $region37: #{tpu_custom_call.1} parent=1 // pred_fallthru
      _
    // Predicated region
    $region38: #{tpu_custom_call.1} parent=1 // pred_check
      _
    $region39: #{tpu_custom_call.1} parent=1 // pred_check_branch
      %115 = sbr.rel (0) target = $region41
    $region40: #{tpu_custom_call.1} parent=1 // pred_region
      %116 = dma.done [#allocation3], 128
    $region41: #{tpu_custom_call.1} parent=1 // pred_fallthru
      _
    // Predicated region
    $region42: #{tpu_custom_call.1} parent=1 // pred_check
      _
    $region43: #{tpu_custom_call.1} parent=1 // pred_check_branch
      %118 = sbr.rel (0) target = $region45
    $region44: #{tpu_custom_call.1} parent=1 // pred_region
      %119 = dma.done [#allocation6], 2048
    $region45: #{tpu_custom_call.1} parent=1 // pred_fallthru
      _
    // Predicated region
    $region46: #{tpu_custom_call.1} parent=1 // pred_check
      _
    $region47: #{tpu_custom_call.1} parent=1 // pred_check_branch
      %121 = sbr.rel (0) target = $region49
    $region48: #{tpu_custom_call.1} parent=1 // pred_region
      %122 = dma.done [#allocation6], 128
    $region49: #{tpu_custom_call.1} parent=1 // pred_fallthru
      _
    // Predicated region
    $region50: #{tpu_custom_call.1} parent=1 // pred_check
      _
    $region51: #{tpu_custom_call.1} parent=1 // pred_check_branch
      %124 = sbr.rel (0) target = $region53
    $region52: #{tpu_custom_call.1} parent=1 // pred_region
      %125 = dma.done [#allocation9], 1024
    $region53: #{tpu_custom_call.1} parent=1 // pred_fallthru
      _
    // Predicated region
    $region54: #{tpu_custom_call.1} parent=1 // pred_check
      _
    $region55: #{tpu_custom_call.1} parent=1 // pred_check_branch
      %127 = sbr.rel (0) target = $region57
    $region56: #{tpu_custom_call.1} parent=1 // pred_region
      %128 = dma.done [#allocation9], 1024
    $region57: #{tpu_custom_call.1} parent=1 // pred_fallthru
      _
    // Predicated region
    $region58: #{tpu_custom_call.1} parent=1 // pred_check
      _
    $region59: #{tpu_custom_call.1} parent=1 // pred_check_branch
      %130 = sbr.rel (0) target = $region61
    $region60: #{tpu_custom_call.1} parent=1 // pred_region
      %131 = dma.done [#allocation12], 256
    $region61: #{tpu_custom_call.1} parent=1 // pred_fallthru
      _
    // Predicated region
    $region62: #{tpu_custom_call.1} parent=1 // pred_check
      _
    $region63: #{tpu_custom_call.1} parent=1 // pred_check_branch
      %133 = sbr.rel (0) target = $region65
    $region64: #{tpu_custom_call.1} parent=1 // pred_region
      %134 = dma.done [#allocation12], 256
    $region65: #{tpu_custom_call.1} parent=1 // pred_fallthru
      _
    // Predicated region
    $region66: #{tpu_custom_call.1} parent=1 // pred_check
      _
    $region67: #{tpu_custom_call.1} parent=1 // pred_check_branch
      %136 = sbr.rel (0) target = $region69
    $region68: #{tpu_custom_call.1} parent=1 // pred_region
      %137 = dma.done [#allocation15], 1024
    $region69: #{tpu_custom_call.1} parent=1 // pred_fallthru
      _
    %v138 = vld [vmem:[#allocation2] sm:$0xff]
    %v139 = vld [vmem:[#allocation5] sm:$0xff]
    %v140 = vld [vmem:[#allocation5 + $0x8] sm:$0xff]
    %v141 = vld [vmem:[#allocation5 + $0x10] sm:$0xff]
    %v142 = vld [vmem:[#allocation5 + $0x18] sm:$0xff]
    %v143 = vld [vmem:[#allocation5 + $0x20] sm:$0xff]
    %v144 = vld [vmem:[#allocation5 + $0x28] sm:$0xff]
    %v145 = vld [vmem:[#allocation5 + $0x30] sm:$0xff]
    %v146 = vld [vmem:[#allocation5 + $0x38] sm:$0xff]
    %v147 = vld [vmem:[#allocation5 + $0x40] sm:$0xff]
    %v148 = vld [vmem:[#allocation5 + $0x48] sm:$0xff]
    %v149 = vld [vmem:[#allocation5 + $0x50] sm:$0xff]
    %v150 = vld [vmem:[#allocation5 + $0x58] sm:$0xff]
    %v151 = vld [vmem:[#allocation5 + $0x60] sm:$0xff]
    %v152 = vld [vmem:[#allocation5 + $0x68] sm:$0xff]
    %v153 = vld [vmem:[#allocation5 + $0x70] sm:$0xff]
    %v154 = vld [vmem:[#allocation5 + $0x78] sm:$0xff]
    %v155 = vld [vmem:[#allocation7] sm:$0xff]
    %v156 = vld [vmem:[#allocation8] sm:$0xff]
    %v157 = vld [vmem:[#allocation8 + $0x8] sm:$0xff]
    %v158 = vld [vmem:[#allocation8 + $0x10] sm:$0xff]
    %v159 = vld [vmem:[#allocation8 + $0x18] sm:$0xff]
    %v160 = vld [vmem:[#allocation8 + $0x20] sm:$0xff]
    %v161 = vld [vmem:[#allocation8 + $0x28] sm:$0xff]
    %v162 = vld [vmem:[#allocation8 + $0x30] sm:$0xff]
    %v163 = vld [vmem:[#allocation8 + $0x38] sm:$0xff]
    %164 = vmatprep.subr.mxu0 0.0
    %165 = vmatpush1.msra.mxu0 %v154
    %166 = vmatprep.subr.mxu0 0.0
    %167 = vmatpush1.msra.mxu0 %v153
    %168 = vmatprep.subr.mxu0 0.0
    %169 = vmatpush1.msra.mxu0 %v152
    %170 = vmatprep.subr.mxu0 0.0
    %171 = vmatpush1.msra.mxu0 %v151
    %172 = vmatprep.subr.mxu0 0.0
    %173 = vmatpush1.msra.mxu0 %v150
    %174 = vmatprep.subr.mxu0 0.0
    %175 = vmatpush1.msra.mxu0 %v149
    %176 = vmatprep.subr.mxu0 0.0
    %177 = vmatpush1.msra.mxu0 %v148
    %178 = vmatprep.subr.mxu0 0.0
    %179 = vmatpush1.msra.mxu0 %v147
    %180 = vmatprep.subr.mxu0 0.0
    %181 = vmatpush1.msra.mxu0 %v146
    %182 = vmatprep.subr.mxu0 0.0
    %183 = vmatpush1.msra.mxu0 %v145
    %184 = vmatprep.subr.mxu0 0.0
    %185 = vmatpush1.msra.mxu0 %v144
    %186 = vmatprep.subr.mxu0 0.0
    %187 = vmatpush1.msra.mxu0 %v143
    %188 = vmatprep.subr.mxu0 0.0
    %189 = vmatpush1.msra.mxu0 %v142
    %190 = vmatprep.subr.mxu0 0.0
    %191 = vmatpush1.msra.mxu0 %v141
    %192 = vmatprep.subr.mxu0 0.0
    %193 = vmatpush1.msra.mxu0 %v140
    %194 = vmatprep.subr.mxu0 0.0
    %195 = vmatpush1.msra.mxu0 %v139
    %196 = vmatprep.subr.mxu0 0.0
    %197 = vmatpush2.msra.mxu0 0.0
    %198 = vmatprep.subr.mxu0 0.0
    %199 = vmatpush2.msra.mxu0 0.0
    %200 = vmatprep.subr.mxu0 0.0
    %201 = vmatpush2.msra.mxu0 0.0
    %202 = vmatprep.subr.mxu0 0.0
    %203 = vmatpush2.msra.mxu0 0.0
    %204 = vmatprep.subr.mxu0 0.0
    %205 = vmatpush2.msra.mxu0 0.0
    %206 = vmatprep.subr.mxu0 0.0
    %207 = vmatpush2.msra.mxu0 0.0
    %208 = vmatprep.subr.mxu0 0.0
    %209 = vmatpush2.msra.mxu0 0.0
    %210 = vmatprep.subr.mxu0 0.0
    %211 = vmatpush2.msra.mxu0 0.0
    %212 = vmatprep.subr.mxu0 0.0
    %213 = vmatpush2.msra.mxu0 0.0
    %214 = vmatprep.subr.mxu0 0.0
    %215 = vmatpush2.msra.mxu0 0.0
    %216 = vmatprep.subr.mxu0 0.0
    %217 = vmatpush2.msra.mxu0 0.0
    %218 = vmatprep.subr.mxu0 0.0
    %219 = vmatpush2.msra.mxu0 0.0
    %220 = vmatprep.subr.mxu0 0.0
    %221 = vmatpush2.msra.mxu0 0.0
    %222 = vmatprep.subr.mxu0 0.0
    %223 = vmatpush2.msra.mxu0 0.0
    %224 = vmatprep.subr.mxu0 0.0
    %225 = vmatpush2.msra.mxu0 0.0
    %226 = vmatprep.subr.mxu0 0.0
    %227 = vmatpush2.msra.mxu0 0.0
    %228 = vmatprep.mubr.f32.mxu0 0.0
    %229 = vmatmul.mubr.f32.gmra.mxu0 %v138
    %v230 = vpop.f32.mrf.mxu0
    %v231 = vadd.f32 0.0, %v230
    %v232 = vpop.f32.mrf.mxu0
    %233 = vdwg.mxu0
    %v235 = vrot.slane %v231, 4
    %vm237 = vcmask 1043456
    %v238 = vsel %vm237, %v138, %v235
    %vm239 = vcmask 64512
    %v241 = vsel %vm239, %v155, 0
    %243 = vmatprep.subr.mxu0 0.0
    %244 = vmatpush1.msra.mxu0 0.0
    %245 = vmatprep.subr.mxu0 0.0
    %246 = vmatpush1.msra.mxu0 0.0
    %247 = vmatprep.subr.mxu0 0.0
    %248 = vmatpush1.msra.mxu0 0.0
    %249 = vmatprep.subr.mxu0 0.0
    %250 = vmatpush1.msra.mxu0 0.0
    %251 = vmatprep.subr.mxu0 0.0
    %252 = vmatpush1.msra.mxu0 0.0
    %253 = vmatprep.subr.mxu0 0.0
    %254 = vmatpush1.msra.mxu0 0.0
    %255 = vmatprep.subr.mxu0 0.0
    %256 = vmatpush1.msra.mxu0 0.0
    %257 = vmatprep.subr.mxu0 0.0
    %258 = vmatpush1.msra.mxu0 0.0
    %259 = vmatprep.subr.mxu0 0.0
    %260 = vmatpush1.msra.mxu0 0.0
    %261 = vmatprep.subr.mxu0 0.0
    %262 = vmatpush1.msra.mxu0 0.0
    %263 = vmatprep.subr.mxu0 0.0
    %264 = vmatpush1.msra.mxu0 0.0
    %265 = vmatprep.subr.mxu0 0.0
    %266 = vmatpush1.msra.mxu0 0.0
    %267 = vmatprep.subr.mxu0 0.0
    %268 = vmatpush1.msra.mxu0 0.0
    %269 = vmatprep.subr.mxu0 0.0
    %270 = vmatpush1.msra.mxu0 0.0
    %271 = vmatprep.subr.mxu0 0.0
    %272 = vmatpush1.msra.mxu0 0.0
    %273 = vmatprep.subr.mxu0 0.0
    %274 = vmatpush1.msra.mxu0 %v238
    %275 = vmatprep.subr.mxu0 0.0
    %276 = vmatpush2.msra.mxu0 0.0
    %277 = vmatprep.subr.mxu0 0.0
    %278 = vmatpush2.msra.mxu0 0.0
    %279 = vmatprep.subr.mxu0 0.0
    %280 = vmatpush2.msra.mxu0 0.0
    %281 = vmatprep.subr.mxu0 0.0
    %282 = vmatpush2.msra.mxu0 0.0
    %283 = vmatprep.subr.mxu0 0.0
    %284 = vmatpush2.msra.mxu0 0.0
    %285 = vmatprep.subr.mxu0 0.0
    %286 = vmatpush2.msra.mxu0 0.0
    %287 = vmatprep.subr.mxu0 0.0
    %288 = vmatpush2.msra.mxu0 0.0
    %289 = vmatprep.subr.mxu0 0.0
    %290 = vmatpush2.msra.mxu0 0.0
    %291 = vmatprep.subr.mxu0 0.0
    %292 = vmatpush2.msra.mxu0 0.0
    %293 = vmatprep.subr.mxu0 0.0
    %294 = vmatpush2.msra.mxu0 0.0
    %295 = vmatprep.subr.mxu0 0.0
    %296 = vmatpush2.msra.mxu0 0.0
    %297 = vmatprep.subr.mxu0 0.0
    %298 = vmatpush2.msra.mxu0 0.0
    %299 = vmatprep.subr.mxu0 0.0
    %300 = vmatpush2.msra.mxu0 0.0
    %301 = vmatprep.subr.mxu0 0.0
    %302 = vmatpush2.msra.mxu0 0.0
    %303 = vmatprep.subr.mxu0 0.0
    %304 = vmatpush2.msra.mxu0 0.0
    %305 = vmatprep.subr.mxu0 0.0
    %306 = vmatpush2.msra.mxu0 0.0
    %307 = vmatprep.mubr.f32.mxu0 0.0
    %308 = vmatmul.mubr.f32.gmra.mxu0 %v241
    %v309 = vpop.f32.mrf.mxu0
    %v310 = vadd.f32 0.0, %v309
    %v311 = vpop.f32.mrf.mxu0
    %312 = vdwg.mxu0
    %v313 = vmax.f32 %v310, 0.0
    %v315 = vrot.slane %v138, 4
    %v317 = vsel %vm237, %v315, %v231
    %318 = vmatprep.subr.mxu0 0.0
    %319 = vmatpush1.msra.mxu0 0.0
    %320 = vmatprep.subr.mxu0 0.0
    %321 = vmatpush1.msra.mxu0 0.0
    %322 = vmatprep.subr.mxu0 0.0
    %323 = vmatpush1.msra.mxu0 0.0
    %324 = vmatprep.subr.mxu0 0.0
    %325 = vmatpush1.msra.mxu0 0.0
    %326 = vmatprep.subr.mxu0 0.0
    %327 = vmatpush1.msra.mxu0 0.0
    %328 = vmatprep.subr.mxu0 0.0
    %329 = vmatpush1.msra.mxu0 0.0
    %330 = vmatprep.subr.mxu0 0.0
    %331 = vmatpush1.msra.mxu0 0.0
    %332 = vmatprep.subr.mxu0 0.0
    %333 = vmatpush1.msra.mxu0 0.0
    %334 = vmatprep.subr.mxu0 0.0
    %335 = vmatpush1.msra.mxu0 0.0
    %336 = vmatprep.subr.mxu0 0.0
    %337 = vmatpush1.msra.mxu0 0.0
    %338 = vmatprep.subr.mxu0 0.0
    %339 = vmatpush1.msra.mxu0 0.0
    %340 = vmatprep.subr.mxu0 0.0
    %341 = vmatpush1.msra.mxu0 0.0
    %342 = vmatprep.subr.mxu0 0.0
    %343 = vmatpush1.msra.mxu0 0.0
    %344 = vmatprep.subr.mxu0 0.0
    %345 = vmatpush1.msra.mxu0 0.0
    %346 = vmatprep.subr.mxu0 0.0
    %347 = vmatpush1.msra.mxu0 0.0
    %348 = vmatprep.subr.mxu0 0.0
    %349 = vmatpush1.msra.mxu0 %v317
    %350 = vmatprep.subr.mxu0 0.0
    %351 = vmatpush2.msra.mxu0 0.0
    %352 = vmatprep.subr.mxu0 0.0
    %353 = vmatpush2.msra.mxu0 0.0
    %354 = vmatprep.subr.mxu0 0.0
    %355 = vmatpush2.msra.mxu0 0.0
    %356 = vmatprep.subr.mxu0 0.0
    %357 = vmatpush2.msra.mxu0 0.0
    %358 = vmatprep.subr.mxu0 0.0
    %359 = vmatpush2.msra.mxu0 0.0
    %360 = vmatprep.subr.mxu0 0.0
    %361 = vmatpush2.msra.mxu0 0.0
    %362 = vmatprep.subr.mxu0 0.0
    %363 = vmatpush2.msra.mxu0 0.0
    %364 = vmatprep.subr.mxu0 0.0
    %365 = vmatpush2.msra.mxu0 0.0
    %366 = vmatprep.subr.mxu0 0.0
    %367 = vmatpush2.msra.mxu0 0.0
    %368 = vmatprep.subr.mxu0 0.0
    %369 = vmatpush2.msra.mxu0 0.0
    %370 = vmatprep.subr.mxu0 0.0
    %371 = vmatpush2.msra.mxu0 0.0
    %372 = vmatprep.subr.mxu0 0.0
    %373 = vmatpush2.msra.mxu0 0.0
    %374 = vmatprep.subr.mxu0 0.0
    %375 = vmatpush2.msra.mxu0 0.0
    %376 = vmatprep.subr.mxu0 0.0
    %377 = vmatpush2.msra.mxu0 0.0
    %378 = vmatprep.subr.mxu0 0.0
    %379 = vmatpush2.msra.mxu0 0.0
    %380 = vmatprep.subr.mxu0 0.0
    %381 = vmatpush2.msra.mxu0 0.0
    %382 = vmatprep.mubr.f32.mxu0 0.0
    %383 = vmatmul.mubr.f32.gmra.mxu0 %v241
    %v384 = vpop.f32.mrf.mxu0
    %v385 = vadd.f32 0.0, %v384
    %v386 = vpop.f32.mrf.mxu0
    %387 = vdwg.mxu0
    %v388 = vmax.f32 %v385, 0.0
    %v391 = vcombine.high %v313, %v313
    %v393 = vunpack.c.l.s4 1966171168
    %v394 = vunpack.c.0.s8 %v393
    %v395 = vlaneseq
    %v396 = vshrl.u32 %v395, 7
    %v397 = vsub.s32 %v394, %v396
    %v398 = vrot.slane %v313, %v397
    %v400 = vunpack.c.l.s4 1966171168
    %v401 = vunpack.c.0.s8 %v400
    %v402 = vlaneseq
    %v403 = vshrl.u32 %v402, 7
    %v404 = vsub.s32 %v401, %v403
    %v405 = vrot.slane %v391, %v404
    %v406 = vcombine.high %v398, %v398
    %v407 = vcombine.high %v405, %v405
    %v409 = vunpack.c.l.s4 1966171168
    %v410 = vunpack.c.0.s8 %v409
    %v411 = vlaneseq
    %v412 = vshrl.u32 %v411, 7
    %v413 = vsub.s32 %v410, %v412
    %v414 = vrot.slane %v398, %v413
    %v416 = vunpack.c.l.s4 1966171168
    %v417 = vunpack.c.0.s8 %v416
    %v418 = vlaneseq
    %v419 = vshrl.u32 %v418, 7
    %v420 = vsub.s32 %v417, %v419
    %v421 = vrot.slane %v405, %v420
    %v423 = vunpack.c.l.s4 1966171168
    %v424 = vunpack.c.0.s8 %v423
    %v425 = vlaneseq
    %v426 = vshrl.u32 %v425, 7
    %v427 = vsub.s32 %v424, %v426
    %v428 = vrot.slane %v406, %v427
    %v430 = vunpack.c.l.s4 1966171168
    %v431 = vunpack.c.0.s8 %v430
    %v432 = vlaneseq
    %v433 = vshrl.u32 %v432, 7
    %v434 = vsub.s32 %v431, %v433
    %v435 = vrot.slane %v407, %v434
    %v436 = vcombine.high %v414, %v414
    %v437 = vcombine.high %v421, %v421
    %v438 = vcombine.high %v428, %v428
    %v439 = vcombine.high %v435, %v435
    %v440 = vcombine.high %v388, %v388
    %v442 = vunpack.c.l.s4 1966171168
    %v443 = vunpack.c.0.s8 %v442
    %v444 = vlaneseq
    %v445 = vshrl.u32 %v444, 7
    %v446 = vsub.s32 %v443, %v445
    %v447 = vrot.slane %v388, %v446
    %v449 = vunpack.c.l.s4 1966171168
    %v450 = vunpack.c.0.s8 %v449
    %v451 = vlaneseq
    %v452 = vshrl.u32 %v451, 7
    %v453 = vsub.s32 %v450, %v452
    %v454 = vrot.slane %v440, %v453
    %v455 = vcombine.high %v447, %v447
    %v456 = vcombine.high %v454, %v454
    %v458 = vunpack.c.l.s4 1966171168
    %v459 = vunpack.c.0.s8 %v458
    %v460 = vlaneseq
    %v461 = vshrl.u32 %v460, 7
    %v462 = vsub.s32 %v459, %v461
    %v463 = vrot.slane %v447, %v462
    %v465 = vunpack.c.l.s4 1966171168
    %v466 = vunpack.c.0.s8 %v465
    %v467 = vlaneseq
    %v468 = vshrl.u32 %v467, 7
    %v469 = vsub.s32 %v466, %v468
    %v470 = vrot.slane %v454, %v469
    %v472 = vunpack.c.l.s4 1966171168
    %v473 = vunpack.c.0.s8 %v472
    %v474 = vlaneseq
    %v475 = vshrl.u32 %v474, 7
    %v476 = vsub.s32 %v473, %v475
    %v477 = vrot.slane %v455, %v476
    %v479 = vunpack.c.l.s4 1966171168
    %v480 = vunpack.c.0.s8 %v479
    %v481 = vlaneseq
    %v482 = vshrl.u32 %v481, 7
    %v483 = vsub.s32 %v480, %v482
    %v484 = vrot.slane %v456, %v483
    %v485 = vcombine.high %v463, %v463
    %v486 = vcombine.high %v470, %v470
    %v487 = vcombine.high %v477, %v477
    %v488 = vcombine.high %v484, %v484
    %v489 = vlaneseq
    %v490 = vshrl.u32 %v489, 7
    %v491 = vsub.s32 0, %v490
    %v492 = vrot.slane %v414, %v491
    %v493 = vlaneseq
    %v494 = vshrl.u32 %v493, 7
    %v495 = vsub.s32 0, %v494
    %v496 = vrot.slane %v428, %v495
    %v497 = vlaneseq
    %v498 = vshrl.u32 %v497, 7
    %v499 = vsub.s32 0, %v498
    %v500 = vrot.slane %v436, %v499
    %v501 = vlaneseq
    %v502 = vshrl.u32 %v501, 7
    %v503 = vsub.s32 0, %v502
    %v504 = vrot.slane %v438, %v503
    %v505 = vlaneseq
    %v506 = vshrl.u32 %v505, 7
    %v507 = vsub.s32 0, %v506
    %v508 = vrot.slane %v421, %v507
    %v509 = vlaneseq
    %v510 = vshrl.u32 %v509, 7
    %v511 = vsub.s32 0, %v510
    %v512 = vrot.slane %v435, %v511
    %v513 = vlaneseq
    %v514 = vshrl.u32 %v513, 7
    %v515 = vsub.s32 0, %v514
    %v516 = vrot.slane %v437, %v515
    %v517 = vlaneseq
    %v518 = vshrl.u32 %v517, 7
    %v519 = vsub.s32 0, %v518
    %v520 = vrot.slane %v439, %v519
    %v521 = vlaneseq
    %v522 = vshrl.u32 %v521, 7
    %v523 = vsub.s32 0, %v522
    %v524 = vrot.slane %v463, %v523
    %v525 = vlaneseq
    %v526 = vshrl.u32 %v525, 7
    %v527 = vsub.s32 0, %v526
    %v528 = vrot.slane %v477, %v527
    %v529 = vlaneseq
    %v530 = vshrl.u32 %v529, 7
    %v531 = vsub.s32 0, %v530
    %v532 = vrot.slane %v485, %v531
    %v533 = vlaneseq
    %v534 = vshrl.u32 %v533, 7
    %v535 = vsub.s32 0, %v534
    %v536 = vrot.slane %v487, %v535
    %v537 = vlaneseq
    %v538 = vshrl.u32 %v537, 7
    %v539 = vsub.s32 0, %v538
    %v540 = vrot.slane %v470, %v539
    %v541 = vlaneseq
    %v542 = vshrl.u32 %v541, 7
    %v543 = vsub.s32 0, %v542
    %v544 = vrot.slane %v484, %v543
    %v545 = vlaneseq
    %v546 = vshrl.u32 %v545, 7
    %v547 = vsub.s32 0, %v546
    %v548 = vrot.slane %v486, %v547
    %v549 = vlaneseq
    %v550 = vshrl.u32 %v549, 7
    %v551 = vsub.s32 0, %v550
    %v552 = vrot.slane %v488, %v551
    %v569 = vadd.f32 %v492, %v156
    %v570 = vadd.f32 %v496, %v156
    %v571 = vadd.f32 %v500, %v156
    %v572 = vadd.f32 %v504, %v156
    %v573 = vadd.f32 %v508, %v156
    %v574 = vadd.f32 %v512, %v156
    %v575 = vadd.f32 %v516, %v156
    %v576 = vadd.f32 %v520, %v156
    %v577 = vadd.f32 %v524, %v156
    %v578 = vadd.f32 %v528, %v156
    %v579 = vadd.f32 %v532, %v156
    %v580 = vadd.f32 %v536, %v156
    %v581 = vadd.f32 %v540, %v156
    %v582 = vadd.f32 %v544, %v156
    %v583 = vadd.f32 %v548, %v156
    %v584 = vadd.f32 %v552, %v156
    %585 = vmax.xlane.f32.xlu0 %v569
    %v586 = vpop.xlane.xlu0 %585
    %587 = vmax.xlane.f32.xlu0 %v570
    %v588 = vpop.xlane.xlu0 %587
    %589 = vmax.xlane.f32.xlu0 %v571
    %v590 = vpop.xlane.xlu0 %589
    %591 = vmax.xlane.f32.xlu0 %v572
    %v592 = vpop.xlane.xlu0 %591
    %593 = vmax.xlane.f32.xlu0 %v573
    %v594 = vpop.xlane.xlu0 %593
    %595 = vmax.xlane.f32.xlu0 %v574
    %v596 = vpop.xlane.xlu0 %595
    %597 = vmax.xlane.f32.xlu0 %v575
    %v598 = vpop.xlane.xlu0 %597
    %599 = vmax.xlane.f32.xlu0 %v576
    %v600 = vpop.xlane.xlu0 %599
    %601 = vmax.xlane.f32.xlu0 %v577
    %v602 = vpop.xlane.xlu0 %601
    %603 = vmax.xlane.f32.xlu0 %v578
    %v604 = vpop.xlane.xlu0 %603
    %605 = vmax.xlane.f32.xlu0 %v579
    %v606 = vpop.xlane.xlu0 %605
    %607 = vmax.xlane.f32.xlu0 %v580
    %v608 = vpop.xlane.xlu0 %607
    %609 = vmax.xlane.f32.xlu0 %v581
    %v610 = vpop.xlane.xlu0 %609
    %611 = vmax.xlane.f32.xlu0 %v582
    %v612 = vpop.xlane.xlu0 %611
    %613 = vmax.xlane.f32.xlu0 %v583
    %v614 = vpop.xlane.xlu0 %613
    %615 = vmax.xlane.f32.xlu0 %v584
    %v616 = vpop.xlane.xlu0 %615
    %v617 = vadd.f32 %v492, %v157
    %v618 = vadd.f32 %v496, %v157
    %v619 = vadd.f32 %v500, %v157
    %v620 = vadd.f32 %v504, %v157
    %v621 = vadd.f32 %v508, %v157
    %v622 = vadd.f32 %v512, %v157
    %v623 = vadd.f32 %v516, %v157
    %v624 = vadd.f32 %v520, %v157
    %v625 = vadd.f32 %v524, %v157
    %v626 = vadd.f32 %v528, %v157
    %v627 = vadd.f32 %v532, %v157
    %v628 = vadd.f32 %v536, %v157
    %v629 = vadd.f32 %v540, %v157
    %v630 = vadd.f32 %v544, %v157
    %v631 = vadd.f32 %v548, %v157
    %v632 = vadd.f32 %v552, %v157
    %633 = vmax.xlane.f32.xlu0 %v617
    %v634 = vpop.xlane.xlu0 %633
    %635 = vmax.xlane.f32.xlu0 %v618
    %v636 = vpop.xlane.xlu0 %635
    %637 = vmax.xlane.f32.xlu0 %v619
    %v638 = vpop.xlane.xlu0 %637
    %639 = vmax.xlane.f32.xlu0 %v620
    %v640 = vpop.xlane.xlu0 %639
    %641 = vmax.xlane.f32.xlu0 %v621
    %v642 = vpop.xlane.xlu0 %641
    %643 = vmax.xlane.f32.xlu0 %v622
    %v644 = vpop.xlane.xlu0 %643
    %645 = vmax.xlane.f32.xlu0 %v623
    %v646 = vpop.xlane.xlu0 %645
    %647 = vmax.xlane.f32.xlu0 %v624
    %v648 = vpop.xlane.xlu0 %647
    %649 = vmax.xlane.f32.xlu0 %v625
    %v650 = vpop.xlane.xlu0 %649
    %651 = vmax.xlane.f32.xlu0 %v626
    %v652 = vpop.xlane.xlu0 %651
    %653 = vmax.xlane.f32.xlu0 %v627
    %v654 = vpop.xlane.xlu0 %653
    %655 = vmax.xlane.f32.xlu0 %v628
    %v656 = vpop.xlane.xlu0 %655
    %657 = vmax.xlane.f32.xlu0 %v629
    %v658 = vpop.xlane.xlu0 %657
    %659 = vmax.xlane.f32.xlu0 %v630
    %v660 = vpop.xlane.xlu0 %659
    %661 = vmax.xlane.f32.xlu0 %v631
    %v662 = vpop.xlane.xlu0 %661
    %663 = vmax.xlane.f32.xlu0 %v632
    %v664 = vpop.xlane.xlu0 %663
    %v665 = vadd.f32 %v492, %v158
    %v666 = vadd.f32 %v496, %v158
    %v667 = vadd.f32 %v500, %v158
    %v668 = vadd.f32 %v504, %v158
    %v669 = vadd.f32 %v508, %v158
    %v670 = vadd.f32 %v512, %v158
    %v671 = vadd.f32 %v516, %v158
    %v672 = vadd.f32 %v520, %v158
    %v673 = vadd.f32 %v524, %v158
    %v674 = vadd.f32 %v528, %v158
    %v675 = vadd.f32 %v532, %v158
    %v676 = vadd.f32 %v536, %v158
    %v677 = vadd.f32 %v540, %v158
    %v678 = vadd.f32 %v544, %v158
    %v679 = vadd.f32 %v548, %v158
    %v680 = vadd.f32 %v552, %v158
    %681 = vmax.xlane.f32.xlu0 %v665
    %v682 = vpop.xlane.xlu0 %681
    %683 = vmax.xlane.f32.xlu0 %v666
    %v684 = vpop.xlane.xlu0 %683
    %685 = vmax.xlane.f32.xlu0 %v667
    %v686 = vpop.xlane.xlu0 %685
    %687 = vmax.xlane.f32.xlu0 %v668
    %v688 = vpop.xlane.xlu0 %687
    %689 = vmax.xlane.f32.xlu0 %v669
    %v690 = vpop.xlane.xlu0 %689
    %691 = vmax.xlane.f32.xlu0 %v670
    %v692 = vpop.xlane.xlu0 %691
    %693 = vmax.xlane.f32.xlu0 %v671
    %v694 = vpop.xlane.xlu0 %693
    %695 = vmax.xlane.f32.xlu0 %v672
    %v696 = vpop.xlane.xlu0 %695
    %697 = vmax.xlane.f32.xlu0 %v673
    %v698 = vpop.xlane.xlu0 %697
    %699 = vmax.xlane.f32.xlu0 %v674
    %v700 = vpop.xlane.xlu0 %699
    %701 = vmax.xlane.f32.xlu0 %v675
    %v702 = vpop.xlane.xlu0 %701
    %703 = vmax.xlane.f32.xlu0 %v676
    %v704 = vpop.xlane.xlu0 %703
    %705 = vmax.xlane.f32.xlu0 %v677
    %v706 = vpop.xlane.xlu0 %705
    %707 = vmax.xlane.f32.xlu0 %v678
    %v708 = vpop.xlane.xlu0 %707
    %709 = vmax.xlane.f32.xlu0 %v679
    %v710 = vpop.xlane.xlu0 %709
    %711 = vmax.xlane.f32.xlu0 %v680
    %v712 = vpop.xlane.xlu0 %711
    %v713 = vadd.f32 %v492, %v159
    %v714 = vadd.f32 %v496, %v159
    %v715 = vadd.f32 %v500, %v159
    %v716 = vadd.f32 %v504, %v159
    %v717 = vadd.f32 %v508, %v159
    %v718 = vadd.f32 %v512, %v159
    %v719 = vadd.f32 %v516, %v159
    %v720 = vadd.f32 %v520, %v159
    %v721 = vadd.f32 %v524, %v159
    %v722 = vadd.f32 %v528, %v159
    %v723 = vadd.f32 %v532, %v159
    %v724 = vadd.f32 %v536, %v159
    %v725 = vadd.f32 %v540, %v159
    %v726 = vadd.f32 %v544, %v159
    %v727 = vadd.f32 %v548, %v159
    %v728 = vadd.f32 %v552, %v159
    %729 = vmax.xlane.f32.xlu0 %v713
    %v730 = vpop.xlane.xlu0 %729
    %731 = vmax.xlane.f32.xlu0 %v714
    %v732 = vpop.xlane.xlu0 %731
    %733 = vmax.xlane.f32.xlu0 %v715
    %v734 = vpop.xlane.xlu0 %733
    %735 = vmax.xlane.f32.xlu0 %v716
    %v736 = vpop.xlane.xlu0 %735
    %737 = vmax.xlane.f32.xlu0 %v717
    %v738 = vpop.xlane.xlu0 %737
    %739 = vmax.xlane.f32.xlu0 %v718
    %v740 = vpop.xlane.xlu0 %739
    %741 = vmax.xlane.f32.xlu0 %v719
    %v742 = vpop.xlane.xlu0 %741
    %743 = vmax.xlane.f32.xlu0 %v720
    %v744 = vpop.xlane.xlu0 %743
    %745 = vmax.xlane.f32.xlu0 %v721
    %v746 = vpop.xlane.xlu0 %745
    %747 = vmax.xlane.f32.xlu0 %v722
    %v748 = vpop.xlane.xlu0 %747
    %749 = vmax.xlane.f32.xlu0 %v723
    %v750 = vpop.xlane.xlu0 %749
    %751 = vmax.xlane.f32.xlu0 %v724
    %v752 = vpop.xlane.xlu0 %751
    %753 = vmax.xlane.f32.xlu0 %v725
    %v754 = vpop.xlane.xlu0 %753
    %755 = vmax.xlane.f32.xlu0 %v726
    %v756 = vpop.xlane.xlu0 %755
    %757 = vmax.xlane.f32.xlu0 %v727
    %v758 = vpop.xlane.xlu0 %757
    %759 = vmax.xlane.f32.xlu0 %v728
    %v760 = vpop.xlane.xlu0 %759
    %v761 = vadd.f32 %v492, %v160
    %v762 = vadd.f32 %v496, %v160
    %v763 = vadd.f32 %v500, %v160
    %v764 = vadd.f32 %v504, %v160
    %v765 = vadd.f32 %v508, %v160
    %v766 = vadd.f32 %v512, %v160
    %v767 = vadd.f32 %v516, %v160
    %v768 = vadd.f32 %v520, %v160
    %v769 = vadd.f32 %v524, %v160
    %v770 = vadd.f32 %v528, %v160
    %v771 = vadd.f32 %v532, %v160
    %v772 = vadd.f32 %v536, %v160
    %v773 = vadd.f32 %v540, %v160
    %v774 = vadd.f32 %v544, %v160
    %v775 = vadd.f32 %v548, %v160
    %v776 = vadd.f32 %v552, %v160
    %777 = vmax.xlane.f32.xlu0 %v761
    %v778 = vpop.xlane.xlu0 %777
    %779 = vmax.xlane.f32.xlu0 %v762
    %v780 = vpop.xlane.xlu0 %779
    %781 = vmax.xlane.f32.xlu0 %v763
    %v782 = vpop.xlane.xlu0 %781
    %783 = vmax.xlane.f32.xlu0 %v764
    %v784 = vpop.xlane.xlu0 %783
    %785 = vmax.xlane.f32.xlu0 %v765
    %v786 = vpop.xlane.xlu0 %785
    %787 = vmax.xlane.f32.xlu0 %v766
    %v788 = vpop.xlane.xlu0 %787
    %789 = vmax.xlane.f32.xlu0 %v767
    %v790 = vpop.xlane.xlu0 %789
    %791 = vmax.xlane.f32.xlu0 %v768
    %v792 = vpop.xlane.xlu0 %791
    %793 = vmax.xlane.f32.xlu0 %v769
    %v794 = vpop.xlane.xlu0 %793
    %795 = vmax.xlane.f32.xlu0 %v770
    %v796 = vpop.xlane.xlu0 %795
    %797 = vmax.xlane.f32.xlu0 %v771
    %v798 = vpop.xlane.xlu0 %797
    %799 = vmax.xlane.f32.xlu0 %v772
    %v800 = vpop.xlane.xlu0 %799
    %801 = vmax.xlane.f32.xlu0 %v773
    %v802 = vpop.xlane.xlu0 %801
    %803 = vmax.xlane.f32.xlu0 %v774
    %v804 = vpop.xlane.xlu0 %803
    %805 = vmax.xlane.f32.xlu0 %v775
    %v806 = vpop.xlane.xlu0 %805
    %807 = vmax.xlane.f32.xlu0 %v776
    %v808 = vpop.xlane.xlu0 %807
    %v809 = vadd.f32 %v492, %v161
    %v810 = vadd.f32 %v496, %v161
    %v811 = vadd.f32 %v500, %v161
    %v812 = vadd.f32 %v504, %v161
    %v813 = vadd.f32 %v508, %v161
    %v814 = vadd.f32 %v512, %v161
    %v815 = vadd.f32 %v516, %v161
    %v816 = vadd.f32 %v520, %v161
    %v817 = vadd.f32 %v524, %v161
    %v818 = vadd.f32 %v528, %v161
    %v819 = vadd.f32 %v532, %v161
    %v820 = vadd.f32 %v536, %v161
    %v821 = vadd.f32 %v540, %v161
    %v822 = vadd.f32 %v544, %v161
    %v823 = vadd.f32 %v548, %v161
    %v824 = vadd.f32 %v552, %v161
    %825 = vmax.xlane.f32.xlu0 %v809
    %v826 = vpop.xlane.xlu0 %825
    %827 = vmax.xlane.f32.xlu0 %v810
    %v828 = vpop.xlane.xlu0 %827
    %829 = vmax.xlane.f32.xlu0 %v811
    %v830 = vpop.xlane.xlu0 %829
    %831 = vmax.xlane.f32.xlu0 %v812
    %v832 = vpop.xlane.xlu0 %831
    %833 = vmax.xlane.f32.xlu0 %v813
    %v834 = vpop.xlane.xlu0 %833
    %835 = vmax.xlane.f32.xlu0 %v814
    %v836 = vpop.xlane.xlu0 %835
    %837 = vmax.xlane.f32.xlu0 %v815
    %v838 = vpop.xlane.xlu0 %837
    %839 = vmax.xlane.f32.xlu0 %v816
    %v840 = vpop.xlane.xlu0 %839
    %841 = vmax.xlane.f32.xlu0 %v817
    %v842 = vpop.xlane.xlu0 %841
    %843 = vmax.xlane.f32.xlu0 %v818
    %v844 = vpop.xlane.xlu0 %843
    %845 = vmax.xlane.f32.xlu0 %v819
    %v846 = vpop.xlane.xlu0 %845
    %847 = vmax.xlane.f32.xlu0 %v820
    %v848 = vpop.xlane.xlu0 %847
    %849 = vmax.xlane.f32.xlu0 %v821
    %v850 = vpop.xlane.xlu0 %849
    %851 = vmax.xlane.f32.xlu0 %v822
    %v852 = vpop.xlane.xlu0 %851
    %853 = vmax.xlane.f32.xlu0 %v823
    %v854 = vpop.xlane.xlu0 %853
    %855 = vmax.xlane.f32.xlu0 %v824
    %v856 = vpop.xlane.xlu0 %855
    %v857 = vadd.f32 %v492, %v162
    %v858 = vadd.f32 %v496, %v162
    %v859 = vadd.f32 %v500, %v162
    %v860 = vadd.f32 %v504, %v162
    %v861 = vadd.f32 %v508, %v162
    %v862 = vadd.f32 %v512, %v162
    %v863 = vadd.f32 %v516, %v162
    %v864 = vadd.f32 %v520, %v162
    %v865 = vadd.f32 %v524, %v162
    %v866 = vadd.f32 %v528, %v162
    %v867 = vadd.f32 %v532, %v162
    %v868 = vadd.f32 %v536, %v162
    %v869 = vadd.f32 %v540, %v162
    %v870 = vadd.f32 %v544, %v162
    %v871 = vadd.f32 %v548, %v162
    %v872 = vadd.f32 %v552, %v162
    %873 = vmax.xlane.f32.xlu0 %v857
    %v874 = vpop.xlane.xlu0 %873
    %875 = vmax.xlane.f32.xlu0 %v858
    %v876 = vpop.xlane.xlu0 %875
    %877 = vmax.xlane.f32.xlu0 %v859
    %v878 = vpop.xlane.xlu0 %877
    %879 = vmax.xlane.f32.xlu0 %v860
    %v880 = vpop.xlane.xlu0 %879
    %881 = vmax.xlane.f32.xlu0 %v861
    %v882 = vpop.xlane.xlu0 %881
    %883 = vmax.xlane.f32.xlu0 %v862
    %v884 = vpop.xlane.xlu0 %883
    %885 = vmax.xlane.f32.xlu0 %v863
    %v886 = vpop.xlane.xlu0 %885
    %887 = vmax.xlane.f32.xlu0 %v864
    %v888 = vpop.xlane.xlu0 %887
    %889 = vmax.xlane.f32.xlu0 %v865
    %v890 = vpop.xlane.xlu0 %889
    %891 = vmax.xlane.f32.xlu0 %v866
    %v892 = vpop.xlane.xlu0 %891
    %893 = vmax.xlane.f32.xlu0 %v867
    %v894 = vpop.xlane.xlu0 %893
    %895 = vmax.xlane.f32.xlu0 %v868
    %v896 = vpop.xlane.xlu0 %895
    %897 = vmax.xlane.f32.xlu0 %v869
    %v898 = vpop.xlane.xlu0 %897
    %899 = vmax.xlane.f32.xlu0 %v870
    %v900 = vpop.xlane.xlu0 %899
    %901 = vmax.xlane.f32.xlu0 %v871
    %v902 = vpop.xlane.xlu0 %901
    %903 = vmax.xlane.f32.xlu0 %v872
    %v904 = vpop.xlane.xlu0 %903
    %v905 = vadd.f32 %v492, %v163
    %v906 = vadd.f32 %v496, %v163
    %v907 = vadd.f32 %v500, %v163
    %v908 = vadd.f32 %v504, %v163
    %v909 = vadd.f32 %v508, %v163
    %v910 = vadd.f32 %v512, %v163
    %v911 = vadd.f32 %v516, %v163
    %v912 = vadd.f32 %v520, %v163
    %v913 = vadd.f32 %v524, %v163
    %v914 = vadd.f32 %v528, %v163
    %v915 = vadd.f32 %v532, %v163
    %v916 = vadd.f32 %v536, %v163
    %v917 = vadd.f32 %v540, %v163
    %v918 = vadd.f32 %v544, %v163
    %v919 = vadd.f32 %v548, %v163
    %v920 = vadd.f32 %v552, %v163
    %921 = vmax.xlane.f32.xlu0 %v905
    %v922 = vpop.xlane.xlu0 %921
    %923 = vmax.xlane.f32.xlu0 %v906
    %v924 = vpop.xlane.xlu0 %923
    %925 = vmax.xlane.f32.xlu0 %v907
    %v926 = vpop.xlane.xlu0 %925
    %927 = vmax.xlane.f32.xlu0 %v908
    %v928 = vpop.xlane.xlu0 %927
    %929 = vmax.xlane.f32.xlu0 %v909
    %v930 = vpop.xlane.xlu0 %929
    %931 = vmax.xlane.f32.xlu0 %v910
    %v932 = vpop.xlane.xlu0 %931
    %933 = vmax.xlane.f32.xlu0 %v911
    %v934 = vpop.xlane.xlu0 %933
    %935 = vmax.xlane.f32.xlu0 %v912
    %v936 = vpop.xlane.xlu0 %935
    %937 = vmax.xlane.f32.xlu0 %v913
    %v938 = vpop.xlane.xlu0 %937
    %939 = vmax.xlane.f32.xlu0 %v914
    %v940 = vpop.xlane.xlu0 %939
    %941 = vmax.xlane.f32.xlu0 %v915
    %v942 = vpop.xlane.xlu0 %941
    %943 = vmax.xlane.f32.xlu0 %v916
    %v944 = vpop.xlane.xlu0 %943
    %945 = vmax.xlane.f32.xlu0 %v917
    %v946 = vpop.xlane.xlu0 %945
    %947 = vmax.xlane.f32.xlu0 %v918
    %v948 = vpop.xlane.xlu0 %947
    %949 = vmax.xlane.f32.xlu0 %v919
    %v950 = vpop.xlane.xlu0 %949
    %951 = vmax.xlane.f32.xlu0 %v920
    %v952 = vpop.xlane.xlu0 %951
    %v969 = vlaneseq
    %v970 = vand.u32 %v969, 127
    %v971 = vlaneseq
    %v972 = vshrl.u32 %v971, 7
    %v973 = vsub.s32 %v970, %v972
    %v974 = vrot.slane %v586, %v973
    %v975 = vlaneseq
    %v976 = vshrl.u32 %v975, 7
    %v977 = vsub.s32 %v970, %v976
    %v978 = vrot.slane %v588, %v977
    %v979 = vlaneseq
    %v980 = vshrl.u32 %v979, 7
    %v981 = vsub.s32 %v970, %v980
    %v982 = vrot.slane %v590, %v981
    %v983 = vlaneseq
    %v984 = vshrl.u32 %v983, 7
    %v985 = vsub.s32 %v970, %v984
    %v986 = vrot.slane %v592, %v985
    %v987 = vlaneseq
    %v988 = vshrl.u32 %v987, 7
    %v989 = vsub.s32 %v970, %v988
    %v990 = vrot.slane %v594, %v989
    %v991 = vlaneseq
    %v992 = vshrl.u32 %v991, 7
    %v993 = vsub.s32 %v970, %v992
    %v994 = vrot.slane %v596, %v993
    %v995 = vlaneseq
    %v996 = vshrl.u32 %v995, 7
    %v997 = vsub.s32 %v970, %v996
    %v998 = vrot.slane %v598, %v997
    %v999 = vlaneseq
    %v1000 = vshrl.u32 %v999, 7
    %v1001 = vsub.s32 %v970, %v1000
    %v1002 = vrot.slane %v600, %v1001
    %v1003 = vlaneseq
    %v1004 = vshrl.u32 %v1003, 7
    %v1005 = vsub.s32 %v970, %v1004
    %v1006 = vrot.slane %v602, %v1005
    %v1007 = vlaneseq
    %v1008 = vshrl.u32 %v1007, 7
    %v1009 = vsub.s32 %v970, %v1008
    %v1010 = vrot.slane %v604, %v1009
    %v1011 = vlaneseq
    %v1012 = vshrl.u32 %v1011, 7
    %v1013 = vsub.s32 %v970, %v1012
    %v1014 = vrot.slane %v606, %v1013
    %v1015 = vlaneseq
    %v1016 = vshrl.u32 %v1015, 7
    %v1017 = vsub.s32 %v970, %v1016
    %v1018 = vrot.slane %v608, %v1017
    %v1019 = vlaneseq
    %v1020 = vshrl.u32 %v1019, 7
    %v1021 = vsub.s32 %v970, %v1020
    %v1022 = vrot.slane %v610, %v1021
    %v1023 = vlaneseq
    %v1024 = vshrl.u32 %v1023, 7
    %v1025 = vsub.s32 %v970, %v1024
    %v1026 = vrot.slane %v612, %v1025
    %v1027 = vlaneseq
    %v1028 = vshrl.u32 %v1027, 7
    %v1029 = vsub.s32 %v970, %v1028
    %v1030 = vrot.slane %v614, %v1029
    %v1031 = vlaneseq
    %v1032 = vshrl.u32 %v1031, 7
    %v1033 = vsub.s32 %v970, %v1032
    %v1034 = vrot.slane %v616, %v1033
    %vm1035 = vcmask 1041409
    %v1036 = vsel %vm1035, %v978, %v974
    %vm1037 = vcmask 1042434
    %v1038 = vsel %vm1037, %v982, %v1036
    %vm1039 = vcmask 1043459
    %v1040 = vsel %vm1039, %v986, %v1038
    %vm1041 = vcmask 1044484
    %v1042 = vsel %vm1041, %v990, %v1040
    %vm1043 = vcmask 1045509
    %v1044 = vsel %vm1043, %v994, %v1042
    %vm1045 = vcmask 1046534
    %v1046 = vsel %vm1045, %v998, %v1044
    %vm1047 = vcmask 1047559
    %v1048 = vsel %vm1047, %v1002, %v1046
    %v1049 = vsel %vm1035, %v1010, %v1006
    %v1050 = vsel %vm1037, %v1014, %v1049
    %v1051 = vsel %vm1039, %v1018, %v1050
    %v1052 = vsel %vm1041, %v1022, %v1051
    %v1053 = vsel %vm1043, %v1026, %v1052
    %v1054 = vsel %vm1045, %v1030, %v1053
    %v1055 = vsel %vm1047, %v1034, %v1054
    %v1074 = vadd.s32 %v970, 4294967288
    %v1075 = vlaneseq
    %v1076 = vshrl.u32 %v1075, 7
    %v1077 = vsub.s32 %v1074, %v1076
    %v1078 = vrot.slane %v634, %v1077
    %v1079 = vlaneseq
    %v1080 = vshrl.u32 %v1079, 7
    %v1081 = vsub.s32 %v1074, %v1080
    %v1082 = vrot.slane %v636, %v1081
    %v1083 = vlaneseq
    %v1084 = vshrl.u32 %v1083, 7
    %v1085 = vsub.s32 %v1074, %v1084
    %v1086 = vrot.slane %v638, %v1085
    %v1087 = vlaneseq
    %v1088 = vshrl.u32 %v1087, 7
    %v1089 = vsub.s32 %v1074, %v1088
    %v1090 = vrot.slane %v640, %v1089
    %v1091 = vlaneseq
    %v1092 = vshrl.u32 %v1091, 7
    %v1093 = vsub.s32 %v1074, %v1092
    %v1094 = vrot.slane %v642, %v1093
    %v1095 = vlaneseq
    %v1096 = vshrl.u32 %v1095, 7
    %v1097 = vsub.s32 %v1074, %v1096
    %v1098 = vrot.slane %v644, %v1097
    %v1099 = vlaneseq
    %v1100 = vshrl.u32 %v1099, 7
    %v1101 = vsub.s32 %v1074, %v1100
    %v1102 = vrot.slane %v646, %v1101
    %v1103 = vlaneseq
    %v1104 = vshrl.u32 %v1103, 7
    %v1105 = vsub.s32 %v1074, %v1104
    %v1106 = vrot.slane %v648, %v1105
    %v1107 = vlaneseq
    %v1108 = vshrl.u32 %v1107, 7
    %v1109 = vsub.s32 %v1074, %v1108
    %v1110 = vrot.slane %v650, %v1109
    %v1111 = vlaneseq
    %v1112 = vshrl.u32 %v1111, 7
    %v1113 = vsub.s32 %v1074, %v1112
    %v1114 = vrot.slane %v652, %v1113
    %v1115 = vlaneseq
    %v1116 = vshrl.u32 %v1115, 7
    %v1117 = vsub.s32 %v1074, %v1116
    %v1118 = vrot.slane %v654, %v1117
    %v1119 = vlaneseq
    %v1120 = vshrl.u32 %v1119, 7
    %v1121 = vsub.s32 %v1074, %v1120
    %v1122 = vrot.slane %v656, %v1121
    %v1123 = vlaneseq
    %v1124 = vshrl.u32 %v1123, 7
    %v1125 = vsub.s32 %v1074, %v1124
    %v1126 = vrot.slane %v658, %v1125
    %v1127 = vlaneseq
    %v1128 = vshrl.u32 %v1127, 7
    %v1129 = vsub.s32 %v1074, %v1128
    %v1130 = vrot.slane %v660, %v1129
    %v1131 = vlaneseq
    %v1132 = vshrl.u32 %v1131, 7
    %v1133 = vsub.s32 %v1074, %v1132
    %v1134 = vrot.slane %v662, %v1133
    %v1135 = vlaneseq
    %v1136 = vshrl.u32 %v1135, 7
    %v1137 = vsub.s32 %v1074, %v1136
    %v1138 = vrot.slane %v664, %v1137
    %v1139 = vsel %vm1035, %v1082, %v1078
    %v1140 = vsel %vm1037, %v1086, %v1139
    %v1141 = vsel %vm1039, %v1090, %v1140
    %v1142 = vsel %vm1041, %v1094, %v1141
    %v1143 = vsel %vm1043, %v1098, %v1142
    %v1144 = vsel %vm1045, %v1102, %v1143
    %v1145 = vsel %vm1047, %v1106, %v1144
    %v1146 = vsel %vm1035, %v1114, %v1110
    %v1147 = vsel %vm1037, %v1118, %v1146
    %v1148 = vsel %vm1039, %v1122, %v1147
    %v1149 = vsel %vm1041, %v1126, %v1148
    %v1150 = vsel %vm1043, %v1130, %v1149
    %v1151 = vsel %vm1045, %v1134, %v1150
    %v1152 = vsel %vm1047, %v1138, %v1151
    %v1171 = vadd.s32 %v970, 4294967280
    %v1172 = vlaneseq
    %v1173 = vshrl.u32 %v1172, 7
    %v1174 = vsub.s32 %v1171, %v1173
    %v1175 = vrot.slane %v682, %v1174
    %v1176 = vlaneseq
    %v1177 = vshrl.u32 %v1176, 7
    %v1178 = vsub.s32 %v1171, %v1177
    %v1179 = vrot.slane %v684, %v1178
    %v1180 = vlaneseq
    %v1181 = vshrl.u32 %v1180, 7
    %v1182 = vsub.s32 %v1171, %v1181
    %v1183 = vrot.slane %v686, %v1182
    %v1184 = vlaneseq
    %v1185 = vshrl.u32 %v1184, 7
    %v1186 = vsub.s32 %v1171, %v1185
    %v1187 = vrot.slane %v688, %v1186
    %v1188 = vlaneseq
    %v1189 = vshrl.u32 %v1188, 7
    %v1190 = vsub.s32 %v1171, %v1189
    %v1191 = vrot.slane %v690, %v1190
    %v1192 = vlaneseq
    %v1193 = vshrl.u32 %v1192, 7
    %v1194 = vsub.s32 %v1171, %v1193
    %v1195 = vrot.slane %v692, %v1194
    %v1196 = vlaneseq
    %v1197 = vshrl.u32 %v1196, 7
    %v1198 = vsub.s32 %v1171, %v1197
    %v1199 = vrot.slane %v694, %v1198
    %v1200 = vlaneseq
    %v1201 = vshrl.u32 %v1200, 7
    %v1202 = vsub.s32 %v1171, %v1201
    %v1203 = vrot.slane %v696, %v1202
    %v1204 = vlaneseq
    %v1205 = vshrl.u32 %v1204, 7
    %v1206 = vsub.s32 %v1171, %v1205
    %v1207 = vrot.slane %v698, %v1206
    %v1208 = vlaneseq
    %v1209 = vshrl.u32 %v1208, 7
    %v1210 = vsub.s32 %v1171, %v1209
    %v1211 = vrot.slane %v700, %v1210
    %v1212 = vlaneseq
    %v1213 = vshrl.u32 %v1212, 7
    %v1214 = vsub.s32 %v1171, %v1213
    %v1215 = vrot.slane %v702, %v1214
    %v1216 = vlaneseq
    %v1217 = vshrl.u32 %v1216, 7
    %v1218 = vsub.s32 %v1171, %v1217
    %v1219 = vrot.slane %v704, %v1218
    %v1220 = vlaneseq
    %v1221 = vshrl.u32 %v1220, 7
    %v1222 = vsub.s32 %v1171, %v1221
    %v1223 = vrot.slane %v706, %v1222
    %v1224 = vlaneseq
    %v1225 = vshrl.u32 %v1224, 7
    %v1226 = vsub.s32 %v1171, %v1225
    %v1227 = vrot.slane %v708, %v1226
    %v1228 = vlaneseq
    %v1229 = vshrl.u32 %v1228, 7
    %v1230 = vsub.s32 %v1171, %v1229
    %v1231 = vrot.slane %v710, %v1230
    %v1232 = vlaneseq
    %v1233 = vshrl.u32 %v1232, 7
    %v1234 = vsub.s32 %v1171, %v1233
    %v1235 = vrot.slane %v712, %v1234
    %v1236 = vsel %vm1035, %v1179, %v1175
    %v1237 = vsel %vm1037, %v1183, %v1236
    %v1238 = vsel %vm1039, %v1187, %v1237
    %v1239 = vsel %vm1041, %v1191, %v1238
    %v1240 = vsel %vm1043, %v1195, %v1239
    %v1241 = vsel %vm1045, %v1199, %v1240
    %v1242 = vsel %vm1047, %v1203, %v1241
    %v1243 = vsel %vm1035, %v1211, %v1207
    %v1244 = vsel %vm1037, %v1215, %v1243
    %v1245 = vsel %vm1039, %v1219, %v1244
    %v1246 = vsel %vm1041, %v1223, %v1245
    %v1247 = vsel %vm1043, %v1227, %v1246
    %v1248 = vsel %vm1045, %v1231, %v1247
    %v1249 = vsel %vm1047, %v1235, %v1248
    %v1268 = vadd.s32 %v970, 4294967272
    %v1269 = vlaneseq
    %v1270 = vshrl.u32 %v1269, 7
    %v1271 = vsub.s32 %v1268, %v1270
    %v1272 = vrot.slane %v730, %v1271
    %v1273 = vlaneseq
    %v1274 = vshrl.u32 %v1273, 7
    %v1275 = vsub.s32 %v1268, %v1274
    %v1276 = vrot.slane %v732, %v1275
    %v1277 = vlaneseq
    %v1278 = vshrl.u32 %v1277, 7
    %v1279 = vsub.s32 %v1268, %v1278
    %v1280 = vrot.slane %v734, %v1279
    %v1281 = vlaneseq
    %v1282 = vshrl.u32 %v1281, 7
    %v1283 = vsub.s32 %v1268, %v1282
    %v1284 = vrot.slane %v736, %v1283
    %v1285 = vlaneseq
    %v1286 = vshrl.u32 %v1285, 7
    %v1287 = vsub.s32 %v1268, %v1286
    %v1288 = vrot.slane %v738, %v1287
    %v1289 = vlaneseq
    %v1290 = vshrl.u32 %v1289, 7
    %v1291 = vsub.s32 %v1268, %v1290
    %v1292 = vrot.slane %v740, %v1291
    %v1293 = vlaneseq
    %v1294 = vshrl.u32 %v1293, 7
    %v1295 = vsub.s32 %v1268, %v1294
    %v1296 = vrot.slane %v742, %v1295
    %v1297 = vlaneseq
    %v1298 = vshrl.u32 %v1297, 7
    %v1299 = vsub.s32 %v1268, %v1298
    %v1300 = vrot.slane %v744, %v1299
    %v1301 = vlaneseq
    %v1302 = vshrl.u32 %v1301, 7
    %v1303 = vsub.s32 %v1268, %v1302
    %v1304 = vrot.slane %v746, %v1303
    %v1305 = vlaneseq
    %v1306 = vshrl.u32 %v1305, 7
    %v1307 = vsub.s32 %v1268, %v1306
    %v1308 = vrot.slane %v748, %v1307
    %v1309 = vlaneseq
    %v1310 = vshrl.u32 %v1309, 7
    %v1311 = vsub.s32 %v1268, %v1310
    %v1312 = vrot.slane %v750, %v1311
    %v1313 = vlaneseq
    %v1314 = vshrl.u32 %v1313, 7
    %v1315 = vsub.s32 %v1268, %v1314
    %v1316 = vrot.slane %v752, %v1315
    %v1317 = vlaneseq
    %v1318 = vshrl.u32 %v1317, 7
    %v1319 = vsub.s32 %v1268, %v1318
    %v1320 = vrot.slane %v754, %v1319
    %v1321 = vlaneseq
    %v1322 = vshrl.u32 %v1321, 7
    %v1323 = vsub.s32 %v1268, %v1322
    %v1324 = vrot.slane %v756, %v1323
    %v1325 = vlaneseq
    %v1326 = vshrl.u32 %v1325, 7
    %v1327 = vsub.s32 %v1268, %v1326
    %v1328 = vrot.slane %v758, %v1327
    %v1329 = vlaneseq
    %v1330 = vshrl.u32 %v1329, 7
    %v1331 = vsub.s32 %v1268, %v1330
    %v1332 = vrot.slane %v760, %v1331
    %v1333 = vsel %vm1035, %v1276, %v1272
    %v1334 = vsel %vm1037, %v1280, %v1333
    %v1335 = vsel %vm1039, %v1284, %v1334
    %v1336 = vsel %vm1041, %v1288, %v1335
    %v1337 = vsel %vm1043, %v1292, %v1336
    %v1338 = vsel %vm1045, %v1296, %v1337
    %v1339 = vsel %vm1047, %v1300, %v1338
    %v1340 = vsel %vm1035, %v1308, %v1304
    %v1341 = vsel %vm1037, %v1312, %v1340
    %v1342 = vsel %vm1039, %v1316, %v1341
    %v1343 = vsel %vm1041, %v1320, %v1342
    %v1344 = vsel %vm1043, %v1324, %v1343
    %v1345 = vsel %vm1045, %v1328, %v1344
    %v1346 = vsel %vm1047, %v1332, %v1345
    %v1365 = vadd.s32 %v970, 4294967264
    %v1366 = vlaneseq
    %v1367 = vshrl.u32 %v1366, 7
    %v1368 = vsub.s32 %v1365, %v1367
    %v1369 = vrot.slane %v778, %v1368
    %v1370 = vlaneseq
    %v1371 = vshrl.u32 %v1370, 7
    %v1372 = vsub.s32 %v1365, %v1371
    %v1373 = vrot.slane %v780, %v1372
    %v1374 = vlaneseq
    %v1375 = vshrl.u32 %v1374, 7
    %v1376 = vsub.s32 %v1365, %v1375
    %v1377 = vrot.slane %v782, %v1376
    %v1378 = vlaneseq
    %v1379 = vshrl.u32 %v1378, 7
    %v1380 = vsub.s32 %v1365, %v1379
    %v1381 = vrot.slane %v784, %v1380
    %v1382 = vlaneseq
    %v1383 = vshrl.u32 %v1382, 7
    %v1384 = vsub.s32 %v1365, %v1383
    %v1385 = vrot.slane %v786, %v1384
    %v1386 = vlaneseq
    %v1387 = vshrl.u32 %v1386, 7
    %v1388 = vsub.s32 %v1365, %v1387
    %v1389 = vrot.slane %v788, %v1388
    %v1390 = vlaneseq
    %v1391 = vshrl.u32 %v1390, 7
    %v1392 = vsub.s32 %v1365, %v1391
    %v1393 = vrot.slane %v790, %v1392
    %v1394 = vlaneseq
    %v1395 = vshrl.u32 %v1394, 7
    %v1396 = vsub.s32 %v1365, %v1395
    %v1397 = vrot.slane %v792, %v1396
    %v1398 = vlaneseq
    %v1399 = vshrl.u32 %v1398, 7
    %v1400 = vsub.s32 %v1365, %v1399
    %v1401 = vrot.slane %v794, %v1400
    %v1402 = vlaneseq
    %v1403 = vshrl.u32 %v1402, 7
    %v1404 = vsub.s32 %v1365, %v1403
    %v1405 = vrot.slane %v796, %v1404
    %v1406 = vlaneseq
    %v1407 = vshrl.u32 %v1406, 7
    %v1408 = vsub.s32 %v1365, %v1407
    %v1409 = vrot.slane %v798, %v1408
    %v1410 = vlaneseq
    %v1411 = vshrl.u32 %v1410, 7
    %v1412 = vsub.s32 %v1365, %v1411
    %v1413 = vrot.slane %v800, %v1412
    %v1414 = vlaneseq
    %v1415 = vshrl.u32 %v1414, 7
    %v1416 = vsub.s32 %v1365, %v1415
    %v1417 = vrot.slane %v802, %v1416
    %v1418 = vlaneseq
    %v1419 = vshrl.u32 %v1418, 7
    %v1420 = vsub.s32 %v1365, %v1419
    %v1421 = vrot.slane %v804, %v1420
    %v1422 = vlaneseq
    %v1423 = vshrl.u32 %v1422, 7
    %v1424 = vsub.s32 %v1365, %v1423
    %v1425 = vrot.slane %v806, %v1424
    %v1426 = vlaneseq
    %v1427 = vshrl.u32 %v1426, 7
    %v1428 = vsub.s32 %v1365, %v1427
    %v1429 = vrot.slane %v808, %v1428
    %v1430 = vsel %vm1035, %v1373, %v1369
    %v1431 = vsel %vm1037, %v1377, %v1430
    %v1432 = vsel %vm1039, %v1381, %v1431
    %v1433 = vsel %vm1041, %v1385, %v1432
    %v1434 = vsel %vm1043, %v1389, %v1433
    %v1435 = vsel %vm1045, %v1393, %v1434
    %v1436 = vsel %vm1047, %v1397, %v1435
    %v1437 = vsel %vm1035, %v1405, %v1401
    %v1438 = vsel %vm1037, %v1409, %v1437
    %v1439 = vsel %vm1039, %v1413, %v1438
    %v1440 = vsel %vm1041, %v1417, %v1439
    %v1441 = vsel %vm1043, %v1421, %v1440
    %v1442 = vsel %vm1045, %v1425, %v1441
    %v1443 = vsel %vm1047, %v1429, %v1442
    %v1462 = vadd.s32 %v970, 4294967256
    %v1463 = vlaneseq
    %v1464 = vshrl.u32 %v1463, 7
    %v1465 = vsub.s32 %v1462, %v1464
    %v1466 = vrot.slane %v826, %v1465
    %v1467 = vlaneseq
    %v1468 = vshrl.u32 %v1467, 7
    %v1469 = vsub.s32 %v1462, %v1468
    %v1470 = vrot.slane %v828, %v1469
    %v1471 = vlaneseq
    %v1472 = vshrl.u32 %v1471, 7
    %v1473 = vsub.s32 %v1462, %v1472
    %v1474 = vrot.slane %v830, %v1473
    %v1475 = vlaneseq
    %v1476 = vshrl.u32 %v1475, 7
    %v1477 = vsub.s32 %v1462, %v1476
    %v1478 = vrot.slane %v832, %v1477
    %v1479 = vlaneseq
    %v1480 = vshrl.u32 %v1479, 7
    %v1481 = vsub.s32 %v1462, %v1480
    %v1482 = vrot.slane %v834, %v1481
    %v1483 = vlaneseq
    %v1484 = vshrl.u32 %v1483, 7
    %v1485 = vsub.s32 %v1462, %v1484
    %v1486 = vrot.slane %v836, %v1485
    %v1487 = vlaneseq
    %v1488 = vshrl.u32 %v1487, 7
    %v1489 = vsub.s32 %v1462, %v1488
    %v1490 = vrot.slane %v838, %v1489
    %v1491 = vlaneseq
    %v1492 = vshrl.u32 %v1491, 7
    %v1493 = vsub.s32 %v1462, %v1492
    %v1494 = vrot.slane %v840, %v1493
    %v1495 = vlaneseq
    %v1496 = vshrl.u32 %v1495, 7
    %v1497 = vsub.s32 %v1462, %v1496
    %v1498 = vrot.slane %v842, %v1497
    %v1499 = vlaneseq
    %v1500 = vshrl.u32 %v1499, 7
    %v1501 = vsub.s32 %v1462, %v1500
    %v1502 = vrot.slane %v844, %v1501
    %v1503 = vlaneseq
    %v1504 = vshrl.u32 %v1503, 7
    %v1505 = vsub.s32 %v1462, %v1504
    %v1506 = vrot.slane %v846, %v1505
    %v1507 = vlaneseq
    %v1508 = vshrl.u32 %v1507, 7
    %v1509 = vsub.s32 %v1462, %v1508
    %v1510 = vrot.slane %v848, %v1509
    %v1511 = vlaneseq
    %v1512 = vshrl.u32 %v1511, 7
    %v1513 = vsub.s32 %v1462, %v1512
    %v1514 = vrot.slane %v850, %v1513
    %v1515 = vlaneseq
    %v1516 = vshrl.u32 %v1515, 7
    %v1517 = vsub.s32 %v1462, %v1516
    %v1518 = vrot.slane %v852, %v1517
    %v1519 = vlaneseq
    %v1520 = vshrl.u32 %v1519, 7
    %v1521 = vsub.s32 %v1462, %v1520
    %v1522 = vrot.slane %v854, %v1521
    %v1523 = vlaneseq
    %v1524 = vshrl.u32 %v1523, 7
    %v1525 = vsub.s32 %v1462, %v1524
    %v1526 = vrot.slane %v856, %v1525
    %v1527 = vsel %vm1035, %v1470, %v1466
    %v1528 = vsel %vm1037, %v1474, %v1527
    %v1529 = vsel %vm1039, %v1478, %v1528
    %v1530 = vsel %vm1041, %v1482, %v1529
    %v1531 = vsel %vm1043, %v1486, %v1530
    %v1532 = vsel %vm1045, %v1490, %v1531
    %v1533 = vsel %vm1047, %v1494, %v1532
    %v1534 = vsel %vm1035, %v1502, %v1498
    %v1535 = vsel %vm1037, %v1506, %v1534
    %v1536 = vsel %vm1039, %v1510, %v1535
    %v1537 = vsel %vm1041, %v1514, %v1536
    %v1538 = vsel %vm1043, %v1518, %v1537
    %v1539 = vsel %vm1045, %v1522, %v1538
    %v1540 = vsel %vm1047, %v1526, %v1539
    %v1559 = vadd.s32 %v970, 4294967248
    %v1560 = vlaneseq
    %v1561 = vshrl.u32 %v1560, 7
    %v1562 = vsub.s32 %v1559, %v1561
    %v1563 = vrot.slane %v874, %v1562
    %v1564 = vlaneseq
    %v1565 = vshrl.u32 %v1564, 7
    %v1566 = vsub.s32 %v1559, %v1565
    %v1567 = vrot.slane %v876, %v1566
    %v1568 = vlaneseq
    %v1569 = vshrl.u32 %v1568, 7
    %v1570 = vsub.s32 %v1559, %v1569
    %v1571 = vrot.slane %v878, %v1570
    %v1572 = vlaneseq
    %v1573 = vshrl.u32 %v1572, 7
    %v1574 = vsub.s32 %v1559, %v1573
    %v1575 = vrot.slane %v880, %v1574
    %v1576 = vlaneseq
    %v1577 = vshrl.u32 %v1576, 7
    %v1578 = vsub.s32 %v1559, %v1577
    %v1579 = vrot.slane %v882, %v1578
    %v1580 = vlaneseq
    %v1581 = vshrl.u32 %v1580, 7
    %v1582 = vsub.s32 %v1559, %v1581
    %v1583 = vrot.slane %v884, %v1582
    %v1584 = vlaneseq
    %v1585 = vshrl.u32 %v1584, 7
    %v1586 = vsub.s32 %v1559, %v1585
    %v1587 = vrot.slane %v886, %v1586
    %v1588 = vlaneseq
    %v1589 = vshrl.u32 %v1588, 7
    %v1590 = vsub.s32 %v1559, %v1589
    %v1591 = vrot.slane %v888, %v1590
    %v1592 = vlaneseq
    %v1593 = vshrl.u32 %v1592, 7
    %v1594 = vsub.s32 %v1559, %v1593
    %v1595 = vrot.slane %v890, %v1594
    %v1596 = vlaneseq
    %v1597 = vshrl.u32 %v1596, 7
    %v1598 = vsub.s32 %v1559, %v1597
    %v1599 = vrot.slane %v892, %v1598
    %v1600 = vlaneseq
    %v1601 = vshrl.u32 %v1600, 7
    %v1602 = vsub.s32 %v1559, %v1601
    %v1603 = vrot.slane %v894, %v1602
    %v1604 = vlaneseq
    %v1605 = vshrl.u32 %v1604, 7
    %v1606 = vsub.s32 %v1559, %v1605
    %v1607 = vrot.slane %v896, %v1606
    %v1608 = vlaneseq
    %v1609 = vshrl.u32 %v1608, 7
    %v1610 = vsub.s32 %v1559, %v1609
    %v1611 = vrot.slane %v898, %v1610
    %v1612 = vlaneseq
    %v1613 = vshrl.u32 %v1612, 7
    %v1614 = vsub.s32 %v1559, %v1613
    %v1615 = vrot.slane %v900, %v1614
    %v1616 = vlaneseq
    %v1617 = vshrl.u32 %v1616, 7
    %v1618 = vsub.s32 %v1559, %v1617
    %v1619 = vrot.slane %v902, %v1618
    %v1620 = vlaneseq
    %v1621 = vshrl.u32 %v1620, 7
    %v1622 = vsub.s32 %v1559, %v1621
    %v1623 = vrot.slane %v904, %v1622
    %v1624 = vsel %vm1035, %v1567, %v1563
    %v1625 = vsel %vm1037, %v1571, %v1624
    %v1626 = vsel %vm1039, %v1575, %v1625
    %v1627 = vsel %vm1041, %v1579, %v1626
    %v1628 = vsel %vm1043, %v1583, %v1627
    %v1629 = vsel %vm1045, %v1587, %v1628
    %v1630 = vsel %vm1047, %v1591, %v1629
    %v1631 = vsel %vm1035, %v1599, %v1595
    %v1632 = vsel %vm1037, %v1603, %v1631
    %v1633 = vsel %vm1039, %v1607, %v1632
    %v1634 = vsel %vm1041, %v1611, %v1633
    %v1635 = vsel %vm1043, %v1615, %v1634
    %v1636 = vsel %vm1045, %v1619, %v1635
    %v1637 = vsel %vm1047, %v1623, %v1636
    %v1656 = vadd.s32 %v970, 4294967240
    %v1657 = vlaneseq
    %v1658 = vshrl.u32 %v1657, 7
    %v1659 = vsub.s32 %v1656, %v1658
    %v1660 = vrot.slane %v922, %v1659
    %v1661 = vlaneseq
    %v1662 = vshrl.u32 %v1661, 7
    %v1663 = vsub.s32 %v1656, %v1662
    %v1664 = vrot.slane %v924, %v1663
    %v1665 = vlaneseq
    %v1666 = vshrl.u32 %v1665, 7
    %v1667 = vsub.s32 %v1656, %v1666
    %v1668 = vrot.slane %v926, %v1667
    %v1669 = vlaneseq
    %v1670 = vshrl.u32 %v1669, 7
    %v1671 = vsub.s32 %v1656, %v1670
    %v1672 = vrot.slane %v928, %v1671
    %v1673 = vlaneseq
    %v1674 = vshrl.u32 %v1673, 7
    %v1675 = vsub.s32 %v1656, %v1674
    %v1676 = vrot.slane %v930, %v1675
    %v1677 = vlaneseq
    %v1678 = vshrl.u32 %v1677, 7
    %v1679 = vsub.s32 %v1656, %v1678
    %v1680 = vrot.slane %v932, %v1679
    %v1681 = vlaneseq
    %v1682 = vshrl.u32 %v1681, 7
    %v1683 = vsub.s32 %v1656, %v1682
    %v1684 = vrot.slane %v934, %v1683
    %v1685 = vlaneseq
    %v1686 = vshrl.u32 %v1685, 7
    %v1687 = vsub.s32 %v1656, %v1686
    %v1688 = vrot.slane %v936, %v1687
    %v1689 = vlaneseq
    %v1690 = vshrl.u32 %v1689, 7
    %v1691 = vsub.s32 %v1656, %v1690
    %v1692 = vrot.slane %v938, %v1691
    %v1693 = vlaneseq
    %v1694 = vshrl.u32 %v1693, 7
    %v1695 = vsub.s32 %v1656, %v1694
    %v1696 = vrot.slane %v940, %v1695
    %v1697 = vlaneseq
    %v1698 = vshrl.u32 %v1697, 7
    %v1699 = vsub.s32 %v1656, %v1698
    %v1700 = vrot.slane %v942, %v1699
    %v1701 = vlaneseq
    %v1702 = vshrl.u32 %v1701, 7
    %v1703 = vsub.s32 %v1656, %v1702
    %v1704 = vrot.slane %v944, %v1703
    %v1705 = vlaneseq
    %v1706 = vshrl.u32 %v1705, 7
    %v1707 = vsub.s32 %v1656, %v1706
    %v1708 = vrot.slane %v946, %v1707
    %v1709 = vlaneseq
    %v1710 = vshrl.u32 %v1709, 7
    %v1711 = vsub.s32 %v1656, %v1710
    %v1712 = vrot.slane %v948, %v1711
    %v1713 = vlaneseq
    %v1714 = vshrl.u32 %v1713, 7
    %v1715 = vsub.s32 %v1656, %v1714
    %v1716 = vrot.slane %v950, %v1715
    %v1717 = vlaneseq
    %v1718 = vshrl.u32 %v1717, 7
    %v1719 = vsub.s32 %v1656, %v1718
    %v1720 = vrot.slane %v952, %v1719
    %v1721 = vsel %vm1035, %v1664, %v1660
    %v1722 = vsel %vm1037, %v1668, %v1721
    %v1723 = vsel %vm1039, %v1672, %v1722
    %v1724 = vsel %vm1041, %v1676, %v1723
    %v1725 = vsel %vm1043, %v1680, %v1724
    %v1726 = vsel %vm1045, %v1684, %v1725
    %v1727 = vsel %vm1047, %v1688, %v1726
    %v1728 = vsel %vm1035, %v1696, %v1692
    %v1729 = vsel %vm1037, %v1700, %v1728
    %v1730 = vsel %vm1039, %v1704, %v1729
    %v1731 = vsel %vm1041, %v1708, %v1730
    %v1732 = vsel %vm1043, %v1712, %v1731
    %v1733 = vsel %vm1045, %v1716, %v1732
    %v1734 = vsel %vm1047, %v1720, %v1733
    %v1737 = vsel %vm239, %v1048, %v1145
    %v1738 = vsel %vm239, %v1055, %v1152
    %vm1739 = vcmask 130048
    %v1740 = vsel %vm1739, %v1737, %v1242
    %v1741 = vsel %vm1739, %v1738, %v1249
    %vm1742 = vcmask 195584
    %v1743 = vsel %vm1742, %v1740, %v1339
    %v1744 = vsel %vm1742, %v1741, %v1346
    %vm1745 = vcmask 261120
    %v1746 = vsel %vm1745, %v1743, %v1436
    %v1747 = vsel %vm1745, %v1744, %v1443
    %vm1748 = vcmask 326656
    %v1749 = vsel %vm1748, %v1746, %v1533
    %v1750 = vsel %vm1748, %v1747, %v1540
    %vm1751 = vcmask 392192
    %v1752 = vsel %vm1751, %v1749, %v1630
    %v1753 = vsel %vm1751, %v1750, %v1637
    %vm1754 = vcmask 457728
    %v1755 = vsel %vm1754, %v1752, %v1727
    %v1756 = vsel %vm1754, %v1753, %v1734
    %v1757 = vld [vmem:[#allocation10] sm:$0xff]
    %v1758 = vld [vmem:[#allocation10 + $0x8] sm:$0xff]
    %v1759 = vld [vmem:[#allocation10 + $0x10] sm:$0xff]
    %v1760 = vld [vmem:[#allocation10 + $0x18] sm:$0xff]
    %v1761 = vld [vmem:[#allocation10 + $0x20] sm:$0xff]
    %v1762 = vld [vmem:[#allocation10 + $0x28] sm:$0xff]
    %v1763 = vld [vmem:[#allocation10 + $0x30] sm:$0xff]
    %v1764 = vld [vmem:[#allocation10 + $0x38] sm:$0xff]
    %v1765 = vld [vmem:[#allocation11] sm:$0xff]
    %v1766 = vld [vmem:[#allocation11 + $0x8] sm:$0xff]
    %v1767 = vld [vmem:[#allocation13] sm:$0xff]
    %v1768 = vld [vmem:[#allocation13 + $0x8] sm:$0xff]
    %vm1769 = vcmask 523264
    %v1771 = vsel %vm1769, %v1755, 0
    %v1774 = vsel %vm1769, %v1756, 0
    %1776 = vmatprep.subr.mxu0 0.0
    %1777 = vmatpush1.msra.mxu0 0.0
    %1778 = vmatprep.subr.mxu0 0.0
    %1779 = vmatpush1.msra.mxu0 0.0
    %1780 = vmatprep.subr.mxu0 0.0
    %1781 = vmatpush1.msra.mxu0 0.0
    %1782 = vmatprep.subr.mxu0 0.0
    %1783 = vmatpush1.msra.mxu0 0.0
    %1784 = vmatprep.subr.mxu0 0.0
    %1785 = vmatpush1.msra.mxu0 0.0
    %1786 = vmatprep.subr.mxu0 0.0
    %1787 = vmatpush1.msra.mxu0 0.0
    %1788 = vmatprep.subr.mxu0 0.0
    %1789 = vmatpush1.msra.mxu0 0.0
    %1790 = vmatprep.subr.mxu0 0.0
    %1791 = vmatpush1.msra.mxu0 0.0
    %1792 = vmatprep.subr.mxu0 0.0
    %1793 = vmatpush1.msra.mxu0 %v1764
    %1794 = vmatprep.subr.mxu0 0.0
    %1795 = vmatpush1.msra.mxu0 %v1763
    %1796 = vmatprep.subr.mxu0 0.0
    %1797 = vmatpush1.msra.mxu0 %v1762
    %1798 = vmatprep.subr.mxu0 0.0
    %1799 = vmatpush1.msra.mxu0 %v1761
    %1800 = vmatprep.subr.mxu0 0.0
    %1801 = vmatpush1.msra.mxu0 %v1760
    %1802 = vmatprep.subr.mxu0 0.0
    %1803 = vmatpush1.msra.mxu0 %v1759
    %1804 = vmatprep.subr.mxu0 0.0
    %1805 = vmatpush1.msra.mxu0 %v1758
    %1806 = vmatprep.subr.mxu0 0.0
    %1807 = vmatpush1.msra.mxu0 %v1757
    %1808 = vmatprep.subr.mxu0 0.0
    %1809 = vmatpush2.msra.mxu0 0.0
    %1810 = vmatprep.subr.mxu0 0.0
    %1811 = vmatpush2.msra.mxu0 0.0
    %1812 = vmatprep.subr.mxu0 0.0
    %1813 = vmatpush2.msra.mxu0 0.0
    %1814 = vmatprep.subr.mxu0 0.0
    %1815 = vmatpush2.msra.mxu0 0.0
    %1816 = vmatprep.subr.mxu0 0.0
    %1817 = vmatpush2.msra.mxu0 0.0
    %1818 = vmatprep.subr.mxu0 0.0
    %1819 = vmatpush2.msra.mxu0 0.0
    %1820 = vmatprep.subr.mxu0 0.0
    %1821 = vmatpush2.msra.mxu0 0.0
    %1822 = vmatprep.subr.mxu0 0.0
    %1823 = vmatpush2.msra.mxu0 0.0
    %1824 = vmatprep.subr.mxu0 0.0
    %1825 = vmatpush2.msra.mxu0 0.0
    %1826 = vmatprep.subr.mxu0 0.0
    %1827 = vmatpush2.msra.mxu0 0.0
    %1828 = vmatprep.subr.mxu0 0.0
    %1829 = vmatpush2.msra.mxu0 0.0
    %1830 = vmatprep.subr.mxu0 0.0
    %1831 = vmatpush2.msra.mxu0 0.0
    %1832 = vmatprep.subr.mxu0 0.0
    %1833 = vmatpush2.msra.mxu0 0.0
    %1834 = vmatprep.subr.mxu0 0.0
    %1835 = vmatpush2.msra.mxu0 0.0
    %1836 = vmatprep.subr.mxu0 0.0
    %1837 = vmatpush2.msra.mxu0 0.0
    %1838 = vmatprep.subr.mxu0 0.0
    %1839 = vmatpush2.msra.mxu0 0.0
    %1840 = vmatprep.mubr.f32.mxu0 0.0
    %1841 = vmatmul.mubr.f32.gmra.mxu0 %v1771
    %v1842 = vpop.f32.mrf.mxu0
    %v1843 = vadd.f32 0.0, %v1842
    %v1844 = vpop.f32.mrf.mxu0
    %1845 = vmatprep.mubr.f32.mxu0 0.0
    %1846 = vmatmul.mubr.f32.gmra.mxu0 %v1774
    %v1847 = vpop.f32.mrf.mxu0
    %v1848 = vadd.f32 0.0, %v1847
    %v1849 = vpop.f32.mrf.mxu0
    %1850 = vdwg.mxu0
    %v1852 = vsel %vm1739, %v1765, 0
    %v1855 = vsel %vm1739, %v1766, 0
    %1857 = vmatprep.subr.mxu0 0.0
    %1858 = vmatpush1.msra.mxu0 0.0
    %1859 = vmatprep.subr.mxu0 0.0
    %1860 = vmatpush1.msra.mxu0 0.0
    %1861 = vmatprep.subr.mxu0 0.0
    %1862 = vmatpush1.msra.mxu0 0.0
    %1863 = vmatprep.subr.mxu0 0.0
    %1864 = vmatpush1.msra.mxu0 0.0
    %1865 = vmatprep.subr.mxu0 0.0
    %1866 = vmatpush1.msra.mxu0 0.0
    %1867 = vmatprep.subr.mxu0 0.0
    %1868 = vmatpush1.msra.mxu0 0.0
    %1869 = vmatprep.subr.mxu0 0.0
    %1870 = vmatpush1.msra.mxu0 0.0
    %1871 = vmatprep.subr.mxu0 0.0
    %1872 = vmatpush1.msra.mxu0 0.0
    %1873 = vmatprep.subr.mxu0 0.0
    %1874 = vmatpush1.msra.mxu0 0.0
    %1875 = vmatprep.subr.mxu0 0.0
    %1876 = vmatpush1.msra.mxu0 0.0
    %1877 = vmatprep.subr.mxu0 0.0
    %1878 = vmatpush1.msra.mxu0 0.0
    %1879 = vmatprep.subr.mxu0 0.0
    %1880 = vmatpush1.msra.mxu0 0.0
    %1881 = vmatprep.subr.mxu0 0.0
    %1882 = vmatpush1.msra.mxu0 0.0
    %1883 = vmatprep.subr.mxu0 0.0
    %1884 = vmatpush1.msra.mxu0 0.0
    %1885 = vmatprep.subr.mxu0 0.0
    %1886 = vmatpush1.msra.mxu0 %v1843
    %1887 = vmatprep.subr.mxu0 0.0
    %1888 = vmatpush1.msra.mxu0 %v1755
    %1889 = vmatprep.subr.mxu0 0.0
    %1890 = vmatpush2.msra.mxu0 0.0
    %1891 = vmatprep.subr.mxu0 0.0
    %1892 = vmatpush2.msra.mxu0 0.0
    %1893 = vmatprep.subr.mxu0 0.0
    %1894 = vmatpush2.msra.mxu0 0.0
    %1895 = vmatprep.subr.mxu0 0.0
    %1896 = vmatpush2.msra.mxu0 0.0
    %1897 = vmatprep.subr.mxu0 0.0
    %1898 = vmatpush2.msra.mxu0 0.0
    %1899 = vmatprep.subr.mxu0 0.0
    %1900 = vmatpush2.msra.mxu0 0.0
    %1901 = vmatprep.subr.mxu0 0.0
    %1902 = vmatpush2.msra.mxu0 0.0
    %1903 = vmatprep.subr.mxu0 0.0
    %1904 = vmatpush2.msra.mxu0 0.0
    %1905 = vmatprep.subr.mxu0 0.0
    %1906 = vmatpush2.msra.mxu0 0.0
    %1907 = vmatprep.subr.mxu0 0.0
    %1908 = vmatpush2.msra.mxu0 0.0
    %1909 = vmatprep.subr.mxu0 0.0
    %1910 = vmatpush2.msra.mxu0 0.0
    %1911 = vmatprep.subr.mxu0 0.0
    %1912 = vmatpush2.msra.mxu0 0.0
    %1913 = vmatprep.subr.mxu0 0.0
    %1914 = vmatpush2.msra.mxu0 0.0
    %1915 = vmatprep.subr.mxu0 0.0
    %1916 = vmatpush2.msra.mxu0 0.0
    %1917 = vmatprep.subr.mxu0 0.0
    %1918 = vmatpush2.msra.mxu0 0.0
    %1919 = vmatprep.subr.mxu0 0.0
    %1920 = vmatpush2.msra.mxu0 0.0
    %1921 = vmatprep.mubr.f32.mxu0 0.0
    %1922 = vmatmul.mubr.f32.gmra.mxu0 %v1852
    %v1923 = vpop.f32.mrf.mxu0
    %v1924 = vadd.f32 0.0, %v1923
    %v1925 = vpop.f32.mrf.mxu0
    %1926 = vmatprep.mubr.f32.mxu0 0.0
    %1927 = vmatmul.mubr.f32.gmra.mxu0 %v1855
    %v1928 = vpop.f32.mrf.mxu0
    %v1929 = vadd.f32 0.0, %v1928
    %v1930 = vpop.f32.mrf.mxu0
    %1931 = vdwg.mxu0
    %v1932 = vmax.f32 %v1924, 0.0
    %v1933 = vmax.f32 %v1929, 0.0
    %1934 = vmatprep.subr.mxu0 0.0
    %1935 = vmatpush1.msra.mxu0 0.0
    %1936 = vmatprep.subr.mxu0 0.0
    %1937 = vmatpush1.msra.mxu0 0.0
    %1938 = vmatprep.subr.mxu0 0.0
    %1939 = vmatpush1.msra.mxu0 0.0
    %1940 = vmatprep.subr.mxu0 0.0
    %1941 = vmatpush1.msra.mxu0 0.0
    %1942 = vmatprep.subr.mxu0 0.0
    %1943 = vmatpush1.msra.mxu0 0.0
    %1944 = vmatprep.subr.mxu0 0.0
    %1945 = vmatpush1.msra.mxu0 0.0
    %1946 = vmatprep.subr.mxu0 0.0
    %1947 = vmatpush1.msra.mxu0 0.0
    %1948 = vmatprep.subr.mxu0 0.0
    %1949 = vmatpush1.msra.mxu0 0.0
    %1950 = vmatprep.subr.mxu0 0.0
    %1951 = vmatpush1.msra.mxu0 0.0
    %1952 = vmatprep.subr.mxu0 0.0
    %1953 = vmatpush1.msra.mxu0 0.0
    %1954 = vmatprep.subr.mxu0 0.0
    %1955 = vmatpush1.msra.mxu0 0.0
    %1956 = vmatprep.subr.mxu0 0.0
    %1957 = vmatpush1.msra.mxu0 0.0
    %1958 = vmatprep.subr.mxu0 0.0
    %1959 = vmatpush1.msra.mxu0 0.0
    %1960 = vmatprep.subr.mxu0 0.0
    %1961 = vmatpush1.msra.mxu0 0.0
    %1962 = vmatprep.subr.mxu0 0.0
    %1963 = vmatpush1.msra.mxu0 %v1848
    %1964 = vmatprep.subr.mxu0 0.0
    %1965 = vmatpush1.msra.mxu0 %v1756
    %1966 = vmatprep.subr.mxu0 0.0
    %1967 = vmatpush2.msra.mxu0 0.0
    %1968 = vmatprep.subr.mxu0 0.0
    %1969 = vmatpush2.msra.mxu0 0.0
    %1970 = vmatprep.subr.mxu0 0.0
    %1971 = vmatpush2.msra.mxu0 0.0
    %1972 = vmatprep.subr.mxu0 0.0
    %1973 = vmatpush2.msra.mxu0 0.0
    %1974 = vmatprep.subr.mxu0 0.0
    %1975 = vmatpush2.msra.mxu0 0.0
    %1976 = vmatprep.subr.mxu0 0.0
    %1977 = vmatpush2.msra.mxu0 0.0
    %1978 = vmatprep.subr.mxu0 0.0
    %1979 = vmatpush2.msra.mxu0 0.0
    %1980 = vmatprep.subr.mxu0 0.0
    %1981 = vmatpush2.msra.mxu0 0.0
    %1982 = vmatprep.subr.mxu0 0.0
    %1983 = vmatpush2.msra.mxu0 0.0
    %1984 = vmatprep.subr.mxu0 0.0
    %1985 = vmatpush2.msra.mxu0 0.0
    %1986 = vmatprep.subr.mxu0 0.0
    %1987 = vmatpush2.msra.mxu0 0.0
    %1988 = vmatprep.subr.mxu0 0.0
    %1989 = vmatpush2.msra.mxu0 0.0
    %1990 = vmatprep.subr.mxu0 0.0
    %1991 = vmatpush2.msra.mxu0 0.0
    %1992 = vmatprep.subr.mxu0 0.0
    %1993 = vmatpush2.msra.mxu0 0.0
    %1994 = vmatprep.subr.mxu0 0.0
    %1995 = vmatpush2.msra.mxu0 0.0
    %1996 = vmatprep.subr.mxu0 0.0
    %1997 = vmatpush2.msra.mxu0 0.0
    %1998 = vmatprep.mubr.f32.mxu0 0.0
    %1999 = vmatmul.mubr.f32.gmra.mxu0 %v1852
    %v2000 = vpop.f32.mrf.mxu0
    %v2001 = vadd.f32 0.0, %v2000
    %v2002 = vpop.f32.mrf.mxu0
    %2003 = vmatprep.mubr.f32.mxu0 0.0
    %2004 = vmatmul.mubr.f32.gmra.mxu0 %v1855
    %v2005 = vpop.f32.mrf.mxu0
    %v2006 = vadd.f32 0.0, %v2005
    %v2007 = vpop.f32.mrf.mxu0
    %2008 = vdwg.mxu0
    %v2009 = vmax.f32 %v2001, 0.0
    %v2010 = vmax.f32 %v2006, 0.0
    %v2015 = vcombine.high %v1932, %v1932
    %v2017 = vunpack.c.l.s4 1966171168
    %v2018 = vunpack.c.0.s8 %v2017
    %v2019 = vlaneseq
    %v2020 = vshrl.u32 %v2019, 7
    %v2021 = vsub.s32 %v2018, %v2020
    %v2022 = vrot.slane %v1932, %v2021
    %v2024 = vunpack.c.l.s4 1966171168
    %v2025 = vunpack.c.0.s8 %v2024
    %v2026 = vlaneseq
    %v2027 = vshrl.u32 %v2026, 7
    %v2028 = vsub.s32 %v2025, %v2027
    %v2029 = vrot.slane %v2015, %v2028
    %v2030 = vcombine.high %v2022, %v2022
    %v2031 = vcombine.high %v2029, %v2029
    %v2033 = vunpack.c.l.s4 1966171168
    %v2034 = vunpack.c.0.s8 %v2033
    %v2035 = vlaneseq
    %v2036 = vshrl.u32 %v2035, 7
    %v2037 = vsub.s32 %v2034, %v2036
    %v2038 = vrot.slane %v2022, %v2037
    %v2040 = vunpack.c.l.s4 1966171168
    %v2041 = vunpack.c.0.s8 %v2040
    %v2042 = vlaneseq
    %v2043 = vshrl.u32 %v2042, 7
    %v2044 = vsub.s32 %v2041, %v2043
    %v2045 = vrot.slane %v2029, %v2044
    %v2047 = vunpack.c.l.s4 1966171168
    %v2048 = vunpack.c.0.s8 %v2047
    %v2049 = vlaneseq
    %v2050 = vshrl.u32 %v2049, 7
    %v2051 = vsub.s32 %v2048, %v2050
    %v2052 = vrot.slane %v2030, %v2051
    %v2054 = vunpack.c.l.s4 1966171168
    %v2055 = vunpack.c.0.s8 %v2054
    %v2056 = vlaneseq
    %v2057 = vshrl.u32 %v2056, 7
    %v2058 = vsub.s32 %v2055, %v2057
    %v2059 = vrot.slane %v2031, %v2058
    %v2060 = vcombine.high %v2038, %v2038
    %v2061 = vcombine.high %v2045, %v2045
    %v2062 = vcombine.high %v2052, %v2052
    %v2063 = vcombine.high %v2059, %v2059
    %v2064 = vcombine.high %v1933, %v1933
    %v2066 = vunpack.c.l.s4 1966171168
    %v2067 = vunpack.c.0.s8 %v2066
    %v2068 = vlaneseq
    %v2069 = vshrl.u32 %v2068, 7
    %v2070 = vsub.s32 %v2067, %v2069
    %v2071 = vrot.slane %v1933, %v2070
    %v2073 = vunpack.c.l.s4 1966171168
    %v2074 = vunpack.c.0.s8 %v2073
    %v2075 = vlaneseq
    %v2076 = vshrl.u32 %v2075, 7
    %v2077 = vsub.s32 %v2074, %v2076
    %v2078 = vrot.slane %v2064, %v2077
    %v2079 = vcombine.high %v2071, %v2071
    %v2080 = vcombine.high %v2078, %v2078
    %v2082 = vunpack.c.l.s4 1966171168
    %v2083 = vunpack.c.0.s8 %v2082
    %v2084 = vlaneseq
    %v2085 = vshrl.u32 %v2084, 7
    %v2086 = vsub.s32 %v2083, %v2085
    %v2087 = vrot.slane %v2071, %v2086
    %v2089 = vunpack.c.l.s4 1966171168
    %v2090 = vunpack.c.0.s8 %v2089
    %v2091 = vlaneseq
    %v2092 = vshrl.u32 %v2091, 7
    %v2093 = vsub.s32 %v2090, %v2092
    %v2094 = vrot.slane %v2078, %v2093
    %v2096 = vunpack.c.l.s4 1966171168
    %v2097 = vunpack.c.0.s8 %v2096
    %v2098 = vlaneseq
    %v2099 = vshrl.u32 %v2098, 7
    %v2100 = vsub.s32 %v2097, %v2099
    %v2101 = vrot.slane %v2079, %v2100
    %v2103 = vunpack.c.l.s4 1966171168
    %v2104 = vunpack.c.0.s8 %v2103
    %v2105 = vlaneseq
    %v2106 = vshrl.u32 %v2105, 7
    %v2107 = vsub.s32 %v2104, %v2106
    %v2108 = vrot.slane %v2080, %v2107
    %v2109 = vcombine.high %v2087, %v2087
    %v2110 = vcombine.high %v2094, %v2094
    %v2111 = vcombine.high %v2101, %v2101
    %v2112 = vcombine.high %v2108, %v2108
    %v2113 = vcombine.high %v2009, %v2009
    %v2115 = vunpack.c.l.s4 1966171168
    %v2116 = vunpack.c.0.s8 %v2115
    %v2117 = vlaneseq
    %v2118 = vshrl.u32 %v2117, 7
    %v2119 = vsub.s32 %v2116, %v2118
    %v2120 = vrot.slane %v2009, %v2119
    %v2122 = vunpack.c.l.s4 1966171168
    %v2123 = vunpack.c.0.s8 %v2122
    %v2124 = vlaneseq
    %v2125 = vshrl.u32 %v2124, 7
    %v2126 = vsub.s32 %v2123, %v2125
    %v2127 = vrot.slane %v2113, %v2126
    %v2128 = vcombine.high %v2120, %v2120
    %v2129 = vcombine.high %v2127, %v2127
    %v2131 = vunpack.c.l.s4 1966171168
    %v2132 = vunpack.c.0.s8 %v2131
    %v2133 = vlaneseq
    %v2134 = vshrl.u32 %v2133, 7
    %v2135 = vsub.s32 %v2132, %v2134
    %v2136 = vrot.slane %v2120, %v2135
    %v2138 = vunpack.c.l.s4 1966171168
    %v2139 = vunpack.c.0.s8 %v2138
    %v2140 = vlaneseq
    %v2141 = vshrl.u32 %v2140, 7
    %v2142 = vsub.s32 %v2139, %v2141
    %v2143 = vrot.slane %v2127, %v2142
    %v2145 = vunpack.c.l.s4 1966171168
    %v2146 = vunpack.c.0.s8 %v2145
    %v2147 = vlaneseq
    %v2148 = vshrl.u32 %v2147, 7
    %v2149 = vsub.s32 %v2146, %v2148
    %v2150 = vrot.slane %v2128, %v2149
    %v2152 = vunpack.c.l.s4 1966171168
    %v2153 = vunpack.c.0.s8 %v2152
    %v2154 = vlaneseq
    %v2155 = vshrl.u32 %v2154, 7
    %v2156 = vsub.s32 %v2153, %v2155
    %v2157 = vrot.slane %v2129, %v2156
    %v2158 = vcombine.high %v2136, %v2136
    %v2159 = vcombine.high %v2143, %v2143
    %v2160 = vcombine.high %v2150, %v2150
    %v2161 = vcombine.high %v2157, %v2157
    %v2162 = vcombine.high %v2010, %v2010
    %v2164 = vunpack.c.l.s4 1966171168
    %v2165 = vunpack.c.0.s8 %v2164
    %v2166 = vlaneseq
    %v2167 = vshrl.u32 %v2166, 7
    %v2168 = vsub.s32 %v2165, %v2167
    %v2169 = vrot.slane %v2010, %v2168
    %v2171 = vunpack.c.l.s4 1966171168
    %v2172 = vunpack.c.0.s8 %v2171
    %v2173 = vlaneseq
    %v2174 = vshrl.u32 %v2173, 7
    %v2175 = vsub.s32 %v2172, %v2174
    %v2176 = vrot.slane %v2162, %v2175
    %v2177 = vcombine.high %v2169, %v2169
    %v2178 = vcombine.high %v2176, %v2176
    %v2180 = vunpack.c.l.s4 1966171168
    %v2181 = vunpack.c.0.s8 %v2180
    %v2182 = vlaneseq
    %v2183 = vshrl.u32 %v2182, 7
    %v2184 = vsub.s32 %v2181, %v2183
    %v2185 = vrot.slane %v2169, %v2184
    %v2187 = vunpack.c.l.s4 1966171168
    %v2188 = vunpack.c.0.s8 %v2187
    %v2189 = vlaneseq
    %v2190 = vshrl.u32 %v2189, 7
    %v2191 = vsub.s32 %v2188, %v2190
    %v2192 = vrot.slane %v2176, %v2191
    %v2194 = vunpack.c.l.s4 1966171168
    %v2195 = vunpack.c.0.s8 %v2194
    %v2196 = vlaneseq
    %v2197 = vshrl.u32 %v2196, 7
    %v2198 = vsub.s32 %v2195, %v2197
    %v2199 = vrot.slane %v2177, %v2198
    %v2201 = vunpack.c.l.s4 1966171168
    %v2202 = vunpack.c.0.s8 %v2201
    %v2203 = vlaneseq
    %v2204 = vshrl.u32 %v2203, 7
    %v2205 = vsub.s32 %v2202, %v2204
    %v2206 = vrot.slane %v2178, %v2205
    %v2207 = vcombine.high %v2185, %v2185
    %v2208 = vcombine.high %v2192, %v2192
    %v2209 = vcombine.high %v2199, %v2199
    %v2210 = vcombine.high %v2206, %v2206
    %v2211 = vlaneseq
    %v2212 = vshrl.u32 %v2211, 7
    %v2213 = vsub.s32 0, %v2212
    %v2214 = vrot.slane %v2038, %v2213
    %v2215 = vlaneseq
    %v2216 = vshrl.u32 %v2215, 7
    %v2217 = vsub.s32 0, %v2216
    %v2218 = vrot.slane %v2052, %v2217
    %v2219 = vlaneseq
    %v2220 = vshrl.u32 %v2219, 7
    %v2221 = vsub.s32 0, %v2220
    %v2222 = vrot.slane %v2060, %v2221
    %v2223 = vlaneseq
    %v2224 = vshrl.u32 %v2223, 7
    %v2225 = vsub.s32 0, %v2224
    %v2226 = vrot.slane %v2062, %v2225
    %v2227 = vlaneseq
    %v2228 = vshrl.u32 %v2227, 7
    %v2229 = vsub.s32 0, %v2228
    %v2230 = vrot.slane %v2045, %v2229
    %v2231 = vlaneseq
    %v2232 = vshrl.u32 %v2231, 7
    %v2233 = vsub.s32 0, %v2232
    %v2234 = vrot.slane %v2059, %v2233
    %v2235 = vlaneseq
    %v2236 = vshrl.u32 %v2235, 7
    %v2237 = vsub.s32 0, %v2236
    %v2238 = vrot.slane %v2061, %v2237
    %v2239 = vlaneseq
    %v2240 = vshrl.u32 %v2239, 7
    %v2241 = vsub.s32 0, %v2240
    %v2242 = vrot.slane %v2063, %v2241
    %v2243 = vlaneseq
    %v2244 = vshrl.u32 %v2243, 7
    %v2245 = vsub.s32 0, %v2244
    %v2246 = vrot.slane %v2087, %v2245
    %v2247 = vlaneseq
    %v2248 = vshrl.u32 %v2247, 7
    %v2249 = vsub.s32 0, %v2248
    %v2250 = vrot.slane %v2101, %v2249
    %v2251 = vlaneseq
    %v2252 = vshrl.u32 %v2251, 7
    %v2253 = vsub.s32 0, %v2252
    %v2254 = vrot.slane %v2109, %v2253
    %v2255 = vlaneseq
    %v2256 = vshrl.u32 %v2255, 7
    %v2257 = vsub.s32 0, %v2256
    %v2258 = vrot.slane %v2111, %v2257
    %v2259 = vlaneseq
    %v2260 = vshrl.u32 %v2259, 7
    %v2261 = vsub.s32 0, %v2260
    %v2262 = vrot.slane %v2094, %v2261
    %v2263 = vlaneseq
    %v2264 = vshrl.u32 %v2263, 7
    %v2265 = vsub.s32 0, %v2264
    %v2266 = vrot.slane %v2108, %v2265
    %v2267 = vlaneseq
    %v2268 = vshrl.u32 %v2267, 7
    %v2269 = vsub.s32 0, %v2268
    %v2270 = vrot.slane %v2110, %v2269
    %v2271 = vlaneseq
    %v2272 = vshrl.u32 %v2271, 7
    %v2273 = vsub.s32 0, %v2272
    %v2274 = vrot.slane %v2112, %v2273
    %v2275 = vlaneseq
    %v2276 = vshrl.u32 %v2275, 7
    %v2277 = vsub.s32 0, %v2276
    %v2278 = vrot.slane %v2136, %v2277
    %v2279 = vlaneseq
    %v2280 = vshrl.u32 %v2279, 7
    %v2281 = vsub.s32 0, %v2280
    %v2282 = vrot.slane %v2150, %v2281
    %v2283 = vlaneseq
    %v2284 = vshrl.u32 %v2283, 7
    %v2285 = vsub.s32 0, %v2284
    %v2286 = vrot.slane %v2158, %v2285
    %v2287 = vlaneseq
    %v2288 = vshrl.u32 %v2287, 7
    %v2289 = vsub.s32 0, %v2288
    %v2290 = vrot.slane %v2160, %v2289
    %v2291 = vlaneseq
    %v2292 = vshrl.u32 %v2291, 7
    %v2293 = vsub.s32 0, %v2292
    %v2294 = vrot.slane %v2143, %v2293
    %v2295 = vlaneseq
    %v2296 = vshrl.u32 %v2295, 7
    %v2297 = vsub.s32 0, %v2296
    %v2298 = vrot.slane %v2157, %v2297
    %v2299 = vlaneseq
    %v2300 = vshrl.u32 %v2299, 7
    %v2301 = vsub.s32 0, %v2300
    %v2302 = vrot.slane %v2159, %v2301
    %v2303 = vlaneseq
    %v2304 = vshrl.u32 %v2303, 7
    %v2305 = vsub.s32 0, %v2304
    %v2306 = vrot.slane %v2161, %v2305
    %v2307 = vlaneseq
    %v2308 = vshrl.u32 %v2307, 7
    %v2309 = vsub.s32 0, %v2308
    %v2310 = vrot.slane %v2185, %v2309
    %v2311 = vlaneseq
    %v2312 = vshrl.u32 %v2311, 7
    %v2313 = vsub.s32 0, %v2312
    %v2314 = vrot.slane %v2199, %v2313
    %v2315 = vlaneseq
    %v2316 = vshrl.u32 %v2315, 7
    %v2317 = vsub.s32 0, %v2316
    %v2318 = vrot.slane %v2207, %v2317
    %v2319 = vlaneseq
    %v2320 = vshrl.u32 %v2319, 7
    %v2321 = vsub.s32 0, %v2320
    %v2322 = vrot.slane %v2209, %v2321
    %v2323 = vlaneseq
    %v2324 = vshrl.u32 %v2323, 7
    %v2325 = vsub.s32 0, %v2324
    %v2326 = vrot.slane %v2192, %v2325
    %v2327 = vlaneseq
    %v2328 = vshrl.u32 %v2327, 7
    %v2329 = vsub.s32 0, %v2328
    %v2330 = vrot.slane %v2206, %v2329
    %v2331 = vlaneseq
    %v2332 = vshrl.u32 %v2331, 7
    %v2333 = vsub.s32 0, %v2332
    %v2334 = vrot.slane %v2208, %v2333
    %v2335 = vlaneseq
    %v2336 = vshrl.u32 %v2335, 7
    %v2337 = vsub.s32 0, %v2336
    %v2338 = vrot.slane %v2210, %v2337
    %v2371 = vadd.f32 %v2214, %v1767
    %v2372 = vadd.f32 %v2218, %v1767
    %v2373 = vadd.f32 %v2222, %v1767
    %v2374 = vadd.f32 %v2226, %v1767
    %v2375 = vadd.f32 %v2230, %v1767
    %v2376 = vadd.f32 %v2234, %v1767
    %v2377 = vadd.f32 %v2238, %v1767
    %v2378 = vadd.f32 %v2242, %v1767
    %v2379 = vadd.f32 %v2246, %v1767
    %v2380 = vadd.f32 %v2250, %v1767
    %v2381 = vadd.f32 %v2254, %v1767
    %v2382 = vadd.f32 %v2258, %v1767
    %v2383 = vadd.f32 %v2262, %v1767
    %v2384 = vadd.f32 %v2266, %v1767
    %v2385 = vadd.f32 %v2270, %v1767
    %v2386 = vadd.f32 %v2274, %v1767
    %v2387 = vadd.f32 %v2278, %v1767
    %v2388 = vadd.f32 %v2282, %v1767
    %v2389 = vadd.f32 %v2286, %v1767
    %v2390 = vadd.f32 %v2290, %v1767
    %v2391 = vadd.f32 %v2294, %v1767
    %v2392 = vadd.f32 %v2298, %v1767
    %v2393 = vadd.f32 %v2302, %v1767
    %v2394 = vadd.f32 %v2306, %v1767
    %v2395 = vadd.f32 %v2310, %v1767
    %v2396 = vadd.f32 %v2314, %v1767
    %v2397 = vadd.f32 %v2318, %v1767
    %v2398 = vadd.f32 %v2322, %v1767
    %v2399 = vadd.f32 %v2326, %v1767
    %v2400 = vadd.f32 %v2330, %v1767
    %v2401 = vadd.f32 %v2334, %v1767
    %v2402 = vadd.f32 %v2338, %v1767
    %v2403 = vsel %vm1769, %v2371, -inf
    %2404 = vmax.xlane.f32.xlu0 %v2403
    %v2405 = vpop.xlane.xlu0 %2404
    %v2406 = vsel %vm1769, %v2372, -inf
    %2407 = vmax.xlane.f32.xlu0 %v2406
    %v2408 = vpop.xlane.xlu0 %2407
    %v2409 = vsel %vm1769, %v2373, -inf
    %2410 = vmax.xlane.f32.xlu0 %v2409
    %v2411 = vpop.xlane.xlu0 %2410
    %v2412 = vsel %vm1769, %v2374, -inf
    %2413 = vmax.xlane.f32.xlu0 %v2412
    %v2414 = vpop.xlane.xlu0 %2413
    %v2415 = vsel %vm1769, %v2375, -inf
    %2416 = vmax.xlane.f32.xlu0 %v2415
    %v2417 = vpop.xlane.xlu0 %2416
    %v2418 = vsel %vm1769, %v2376, -inf
    %2419 = vmax.xlane.f32.xlu0 %v2418
    %v2420 = vpop.xlane.xlu0 %2419
    %v2421 = vsel %vm1769, %v2377, -inf
    %2422 = vmax.xlane.f32.xlu0 %v2421
    %v2423 = vpop.xlane.xlu0 %2422
    %v2424 = vsel %vm1769, %v2378, -inf
    %2425 = vmax.xlane.f32.xlu0 %v2424
    %v2426 = vpop.xlane.xlu0 %2425
    %v2427 = vsel %vm1769, %v2379, -inf
    %2428 = vmax.xlane.f32.xlu0 %v2427
    %v2429 = vpop.xlane.xlu0 %2428
    %v2430 = vsel %vm1769, %v2380, -inf
    %2431 = vmax.xlane.f32.xlu0 %v2430
    %v2432 = vpop.xlane.xlu0 %2431
    %v2433 = vsel %vm1769, %v2381, -inf
    %2434 = vmax.xlane.f32.xlu0 %v2433
    %v2435 = vpop.xlane.xlu0 %2434
    %v2436 = vsel %vm1769, %v2382, -inf
    %2437 = vmax.xlane.f32.xlu0 %v2436
    %v2438 = vpop.xlane.xlu0 %2437
    %v2439 = vsel %vm1769, %v2383, -inf
    %2440 = vmax.xlane.f32.xlu0 %v2439
    %v2441 = vpop.xlane.xlu0 %2440
    %v2442 = vsel %vm1769, %v2384, -inf
    %2443 = vmax.xlane.f32.xlu0 %v2442
    %v2444 = vpop.xlane.xlu0 %2443
    %v2445 = vsel %vm1769, %v2385, -inf
    %2446 = vmax.xlane.f32.xlu0 %v2445
    %v2447 = vpop.xlane.xlu0 %2446
    %v2448 = vsel %vm1769, %v2386, -inf
    %2449 = vmax.xlane.f32.xlu0 %v2448
    %v2450 = vpop.xlane.xlu0 %2449
    %v2451 = vsel %vm1769, %v2387, -inf
    %2452 = vmax.xlane.f32.xlu0 %v2451
    %v2453 = vpop.xlane.xlu0 %2452
    %v2454 = vsel %vm1769, %v2388, -inf
    %2455 = vmax.xlane.f32.xlu0 %v2454
    %v2456 = vpop.xlane.xlu0 %2455
    %v2457 = vsel %vm1769, %v2389, -inf
    %2458 = vmax.xlane.f32.xlu0 %v2457
    %v2459 = vpop.xlane.xlu0 %2458
    %v2460 = vsel %vm1769, %v2390, -inf
    %2461 = vmax.xlane.f32.xlu0 %v2460
    %v2462 = vpop.xlane.xlu0 %2461
    %v2463 = vsel %vm1769, %v2391, -inf
    %2464 = vmax.xlane.f32.xlu0 %v2463
    %v2465 = vpop.xlane.xlu0 %2464
    %v2466 = vsel %vm1769, %v2392, -inf
    %2467 = vmax.xlane.f32.xlu0 %v2466
    %v2468 = vpop.xlane.xlu0 %2467
    %v2469 = vsel %vm1769, %v2393, -inf
    %2470 = vmax.xlane.f32.xlu0 %v2469
    %v2471 = vpop.xlane.xlu0 %2470
    %v2472 = vsel %vm1769, %v2394, -inf
    %2473 = vmax.xlane.f32.xlu0 %v2472
    %v2474 = vpop.xlane.xlu0 %2473
    %v2475 = vsel %vm1769, %v2395, -inf
    %2476 = vmax.xlane.f32.xlu0 %v2475
    %v2477 = vpop.xlane.xlu0 %2476
    %v2478 = vsel %vm1769, %v2396, -inf
    %2479 = vmax.xlane.f32.xlu0 %v2478
    %v2480 = vpop.xlane.xlu0 %2479
    %v2481 = vsel %vm1769, %v2397, -inf
    %2482 = vmax.xlane.f32.xlu0 %v2481
    %v2483 = vpop.xlane.xlu0 %2482
    %v2484 = vsel %vm1769, %v2398, -inf
    %2485 = vmax.xlane.f32.xlu0 %v2484
    %v2486 = vpop.xlane.xlu0 %2485
    %v2487 = vsel %vm1769, %v2399, -inf
    %2488 = vmax.xlane.f32.xlu0 %v2487
    %v2489 = vpop.xlane.xlu0 %2488
    %v2490 = vsel %vm1769, %v2400, -inf
    %2491 = vmax.xlane.f32.xlu0 %v2490
    %v2492 = vpop.xlane.xlu0 %2491
    %v2493 = vsel %vm1769, %v2401, -inf
    %2494 = vmax.xlane.f32.xlu0 %v2493
    %v2495 = vpop.xlane.xlu0 %2494
    %v2496 = vsel %vm1769, %v2402, -inf
    %2497 = vmax.xlane.f32.xlu0 %v2496
    %v2498 = vpop.xlane.xlu0 %2497
    %v2499 = vadd.f32 %v2214, %v1768
    %v2500 = vadd.f32 %v2218, %v1768
    %v2501 = vadd.f32 %v2222, %v1768
    %v2502 = vadd.f32 %v2226, %v1768
    %v2503 = vadd.f32 %v2230, %v1768
    %v2504 = vadd.f32 %v2234, %v1768
    %v2505 = vadd.f32 %v2238, %v1768
    %v2506 = vadd.f32 %v2242, %v1768
    %v2507 = vadd.f32 %v2246, %v1768
    %v2508 = vadd.f32 %v2250, %v1768
    %v2509 = vadd.f32 %v2254, %v1768
    %v2510 = vadd.f32 %v2258, %v1768
    %v2511 = vadd.f32 %v2262, %v1768
    %v2512 = vadd.f32 %v2266, %v1768
    %v2513 = vadd.f32 %v2270, %v1768
    %v2514 = vadd.f32 %v2274, %v1768
    %v2515 = vadd.f32 %v2278, %v1768
    %v2516 = vadd.f32 %v2282, %v1768
    %v2517 = vadd.f32 %v2286, %v1768
    %v2518 = vadd.f32 %v2290, %v1768
    %v2519 = vadd.f32 %v2294, %v1768
    %v2520 = vadd.f32 %v2298, %v1768
    %v2521 = vadd.f32 %v2302, %v1768
    %v2522 = vadd.f32 %v2306, %v1768
    %v2523 = vadd.f32 %v2310, %v1768
    %v2524 = vadd.f32 %v2314, %v1768
    %v2525 = vadd.f32 %v2318, %v1768
    %v2526 = vadd.f32 %v2322, %v1768
    %v2527 = vadd.f32 %v2326, %v1768
    %v2528 = vadd.f32 %v2330, %v1768
    %v2529 = vadd.f32 %v2334, %v1768
    %v2530 = vadd.f32 %v2338, %v1768
    %v2531 = vsel %vm1769, %v2499, -inf
    %2532 = vmax.xlane.f32.xlu0 %v2531
    %v2533 = vpop.xlane.xlu0 %2532
    %v2534 = vsel %vm1769, %v2500, -inf
    %2535 = vmax.xlane.f32.xlu0 %v2534
    %v2536 = vpop.xlane.xlu0 %2535
    %v2537 = vsel %vm1769, %v2501, -inf
    %2538 = vmax.xlane.f32.xlu0 %v2537
    %v2539 = vpop.xlane.xlu0 %2538
    %v2540 = vsel %vm1769, %v2502, -inf
    %2541 = vmax.xlane.f32.xlu0 %v2540
    %v2542 = vpop.xlane.xlu0 %2541
    %v2543 = vsel %vm1769, %v2503, -inf
    %2544 = vmax.xlane.f32.xlu0 %v2543
    %v2545 = vpop.xlane.xlu0 %2544
    %v2546 = vsel %vm1769, %v2504, -inf
    %2547 = vmax.xlane.f32.xlu0 %v2546
    %v2548 = vpop.xlane.xlu0 %2547
    %v2549 = vsel %vm1769, %v2505, -inf
    %2550 = vmax.xlane.f32.xlu0 %v2549
    %v2551 = vpop.xlane.xlu0 %2550
    %v2552 = vsel %vm1769, %v2506, -inf
    %2553 = vmax.xlane.f32.xlu0 %v2552
    %v2554 = vpop.xlane.xlu0 %2553
    %v2555 = vsel %vm1769, %v2507, -inf
    %2556 = vmax.xlane.f32.xlu0 %v2555
    %v2557 = vpop.xlane.xlu0 %2556
    %v2558 = vsel %vm1769, %v2508, -inf
    %2559 = vmax.xlane.f32.xlu0 %v2558
    %v2560 = vpop.xlane.xlu0 %2559
    %v2561 = vsel %vm1769, %v2509, -inf
    %2562 = vmax.xlane.f32.xlu0 %v2561
    %v2563 = vpop.xlane.xlu0 %2562
    %v2564 = vsel %vm1769, %v2510, -inf
    %2565 = vmax.xlane.f32.xlu0 %v2564
    %v2566 = vpop.xlane.xlu0 %2565
    %v2567 = vsel %vm1769, %v2511, -inf
    %2568 = vmax.xlane.f32.xlu0 %v2567
    %v2569 = vpop.xlane.xlu0 %2568
    %v2570 = vsel %vm1769, %v2512, -inf
    %2571 = vmax.xlane.f32.xlu0 %v2570
    %v2572 = vpop.xlane.xlu0 %2571
    %v2573 = vsel %vm1769, %v2513, -inf
    %2574 = vmax.xlane.f32.xlu0 %v2573
    %v2575 = vpop.xlane.xlu0 %2574
    %v2576 = vsel %vm1769, %v2514, -inf
    %2577 = vmax.xlane.f32.xlu0 %v2576
    %v2578 = vpop.xlane.xlu0 %2577
    %v2579 = vsel %vm1769, %v2515, -inf
    %2580 = vmax.xlane.f32.xlu0 %v2579
    %v2581 = vpop.xlane.xlu0 %2580
    %v2582 = vsel %vm1769, %v2516, -inf
    %2583 = vmax.xlane.f32.xlu0 %v2582
    %v2584 = vpop.xlane.xlu0 %2583
    %v2585 = vsel %vm1769, %v2517, -inf
    %2586 = vmax.xlane.f32.xlu0 %v2585
    %v2587 = vpop.xlane.xlu0 %2586
    %v2588 = vsel %vm1769, %v2518, -inf
    %2589 = vmax.xlane.f32.xlu0 %v2588
    %v2590 = vpop.xlane.xlu0 %2589
    %v2591 = vsel %vm1769, %v2519, -inf
    %2592 = vmax.xlane.f32.xlu0 %v2591
    %v2593 = vpop.xlane.xlu0 %2592
    %v2594 = vsel %vm1769, %v2520, -inf
    %2595 = vmax.xlane.f32.xlu0 %v2594
    %v2596 = vpop.xlane.xlu0 %2595
    %v2597 = vsel %vm1769, %v2521, -inf
    %2598 = vmax.xlane.f32.xlu0 %v2597
    %v2599 = vpop.xlane.xlu0 %2598
    %v2600 = vsel %vm1769, %v2522, -inf
    %2601 = vmax.xlane.f32.xlu0 %v2600
    %v2602 = vpop.xlane.xlu0 %2601
    %v2603 = vsel %vm1769, %v2523, -inf
    %2604 = vmax.xlane.f32.xlu0 %v2603
    %v2605 = vpop.xlane.xlu0 %2604
    %v2606 = vsel %vm1769, %v2524, -inf
    %2607 = vmax.xlane.f32.xlu0 %v2606
    %v2608 = vpop.xlane.xlu0 %2607
    %v2609 = vsel %vm1769, %v2525, -inf
    %2610 = vmax.xlane.f32.xlu0 %v2609
    %v2611 = vpop.xlane.xlu0 %2610
    %v2612 = vsel %vm1769, %v2526, -inf
    %2613 = vmax.xlane.f32.xlu0 %v2612
    %v2614 = vpop.xlane.xlu0 %2613
    %v2615 = vsel %vm1769, %v2527, -inf
    %2616 = vmax.xlane.f32.xlu0 %v2615
    %v2617 = vpop.xlane.xlu0 %2616
    %v2618 = vsel %vm1769, %v2528, -inf
    %2619 = vmax.xlane.f32.xlu0 %v2618
    %v2620 = vpop.xlane.xlu0 %2619
    %v2621 = vsel %vm1769, %v2529, -inf
    %2622 = vmax.xlane.f32.xlu0 %v2621
    %v2623 = vpop.xlane.xlu0 %2622
    %v2624 = vsel %vm1769, %v2530, -inf
    %2625 = vmax.xlane.f32.xlu0 %v2624
    %v2626 = vpop.xlane.xlu0 %2625
    %v2659 = vlaneseq
    %v2660 = vshrl.u32 %v2659, 7
    %v2661 = vsub.s32 %v970, %v2660
    %v2662 = vrot.slane %v2405, %v2661
    %v2663 = vlaneseq
    %v2664 = vshrl.u32 %v2663, 7
    %v2665 = vsub.s32 %v970, %v2664
    %v2666 = vrot.slane %v2408, %v2665
    %v2667 = vlaneseq
    %v2668 = vshrl.u32 %v2667, 7
    %v2669 = vsub.s32 %v970, %v2668
    %v2670 = vrot.slane %v2411, %v2669
    %v2671 = vlaneseq
    %v2672 = vshrl.u32 %v2671, 7
    %v2673 = vsub.s32 %v970, %v2672
    %v2674 = vrot.slane %v2414, %v2673
    %v2675 = vlaneseq
    %v2676 = vshrl.u32 %v2675, 7
    %v2677 = vsub.s32 %v970, %v2676
    %v2678 = vrot.slane %v2417, %v2677
    %v2679 = vlaneseq
    %v2680 = vshrl.u32 %v2679, 7
    %v2681 = vsub.s32 %v970, %v2680
    %v2682 = vrot.slane %v2420, %v2681
    %v2683 = vlaneseq
    %v2684 = vshrl.u32 %v2683, 7
    %v2685 = vsub.s32 %v970, %v2684
    %v2686 = vrot.slane %v2423, %v2685
    %v2687 = vlaneseq
    %v2688 = vshrl.u32 %v2687, 7
    %v2689 = vsub.s32 %v970, %v2688
    %v2690 = vrot.slane %v2426, %v2689
    %v2691 = vlaneseq
    %v2692 = vshrl.u32 %v2691, 7
    %v2693 = vsub.s32 %v970, %v2692
    %v2694 = vrot.slane %v2429, %v2693
    %v2695 = vlaneseq
    %v2696 = vshrl.u32 %v2695, 7
    %v2697 = vsub.s32 %v970, %v2696
    %v2698 = vrot.slane %v2432, %v2697
    %v2699 = vlaneseq
    %v2700 = vshrl.u32 %v2699, 7
    %v2701 = vsub.s32 %v970, %v2700
    %v2702 = vrot.slane %v2435, %v2701
    %v2703 = vlaneseq
    %v2704 = vshrl.u32 %v2703, 7
    %v2705 = vsub.s32 %v970, %v2704
    %v2706 = vrot.slane %v2438, %v2705
    %v2707 = vlaneseq
    %v2708 = vshrl.u32 %v2707, 7
    %v2709 = vsub.s32 %v970, %v2708
    %v2710 = vrot.slane %v2441, %v2709
    %v2711 = vlaneseq
    %v2712 = vshrl.u32 %v2711, 7
    %v2713 = vsub.s32 %v970, %v2712
    %v2714 = vrot.slane %v2444, %v2713
    %v2715 = vlaneseq
    %v2716 = vshrl.u32 %v2715, 7
    %v2717 = vsub.s32 %v970, %v2716
    %v2718 = vrot.slane %v2447, %v2717
    %v2719 = vlaneseq
    %v2720 = vshrl.u32 %v2719, 7
    %v2721 = vsub.s32 %v970, %v2720
    %v2722 = vrot.slane %v2450, %v2721
    %v2723 = vlaneseq
    %v2724 = vshrl.u32 %v2723, 7
    %v2725 = vsub.s32 %v970, %v2724
    %v2726 = vrot.slane %v2453, %v2725
    %v2727 = vlaneseq
    %v2728 = vshrl.u32 %v2727, 7
    %v2729 = vsub.s32 %v970, %v2728
    %v2730 = vrot.slane %v2456, %v2729
    %v2731 = vlaneseq
    %v2732 = vshrl.u32 %v2731, 7
    %v2733 = vsub.s32 %v970, %v2732
    %v2734 = vrot.slane %v2459, %v2733
    %v2735 = vlaneseq
    %v2736 = vshrl.u32 %v2735, 7
    %v2737 = vsub.s32 %v970, %v2736
    %v2738 = vrot.slane %v2462, %v2737
    %v2739 = vlaneseq
    %v2740 = vshrl.u32 %v2739, 7
    %v2741 = vsub.s32 %v970, %v2740
    %v2742 = vrot.slane %v2465, %v2741
    %v2743 = vlaneseq
    %v2744 = vshrl.u32 %v2743, 7
    %v2745 = vsub.s32 %v970, %v2744
    %v2746 = vrot.slane %v2468, %v2745
    %v2747 = vlaneseq
    %v2748 = vshrl.u32 %v2747, 7
    %v2749 = vsub.s32 %v970, %v2748
    %v2750 = vrot.slane %v2471, %v2749
    %v2751 = vlaneseq
    %v2752 = vshrl.u32 %v2751, 7
    %v2753 = vsub.s32 %v970, %v2752
    %v2754 = vrot.slane %v2474, %v2753
    %v2755 = vlaneseq
    %v2756 = vshrl.u32 %v2755, 7
    %v2757 = vsub.s32 %v970, %v2756
    %v2758 = vrot.slane %v2477, %v2757
    %v2759 = vlaneseq
    %v2760 = vshrl.u32 %v2759, 7
    %v2761 = vsub.s32 %v970, %v2760
    %v2762 = vrot.slane %v2480, %v2761
    %v2763 = vlaneseq
    %v2764 = vshrl.u32 %v2763, 7
    %v2765 = vsub.s32 %v970, %v2764
    %v2766 = vrot.slane %v2483, %v2765
    %v2767 = vlaneseq
    %v2768 = vshrl.u32 %v2767, 7
    %v2769 = vsub.s32 %v970, %v2768
    %v2770 = vrot.slane %v2486, %v2769
    %v2771 = vlaneseq
    %v2772 = vshrl.u32 %v2771, 7
    %v2773 = vsub.s32 %v970, %v2772
    %v2774 = vrot.slane %v2489, %v2773
    %v2775 = vlaneseq
    %v2776 = vshrl.u32 %v2775, 7
    %v2777 = vsub.s32 %v970, %v2776
    %v2778 = vrot.slane %v2492, %v2777
    %v2779 = vlaneseq
    %v2780 = vshrl.u32 %v2779, 7
    %v2781 = vsub.s32 %v970, %v2780
    %v2782 = vrot.slane %v2495, %v2781
    %v2783 = vlaneseq
    %v2784 = vshrl.u32 %v2783, 7
    %v2785 = vsub.s32 %v970, %v2784
    %v2786 = vrot.slane %v2498, %v2785
    %v2787 = vsel %vm1035, %v2666, %v2662
    %v2788 = vsel %vm1037, %v2670, %v2787
    %v2789 = vsel %vm1039, %v2674, %v2788
    %v2790 = vsel %vm1041, %v2678, %v2789
    %v2791 = vsel %vm1043, %v2682, %v2790
    %v2792 = vsel %vm1045, %v2686, %v2791
    %v2793 = vsel %vm1047, %v2690, %v2792
    %v2794 = vsel %vm1035, %v2698, %v2694
    %v2795 = vsel %vm1037, %v2702, %v2794
    %v2796 = vsel %vm1039, %v2706, %v2795
    %v2797 = vsel %vm1041, %v2710, %v2796
    %v2798 = vsel %vm1043, %v2714, %v2797
    %v2799 = vsel %vm1045, %v2718, %v2798
    %v2800 = vsel %vm1047, %v2722, %v2799
    %v2801 = vsel %vm1035, %v2730, %v2726
    %v2802 = vsel %vm1037, %v2734, %v2801
    %v2803 = vsel %vm1039, %v2738, %v2802
    %v2804 = vsel %vm1041, %v2742, %v2803
    %v2805 = vsel %vm1043, %v2746, %v2804
    %v2806 = vsel %vm1045, %v2750, %v2805
    %v2807 = vsel %vm1047, %v2754, %v2806
    %v2808 = vsel %vm1035, %v2762, %v2758
    %v2809 = vsel %vm1037, %v2766, %v2808
    %v2810 = vsel %vm1039, %v2770, %v2809
    %v2811 = vsel %vm1041, %v2774, %v2810
    %v2812 = vsel %vm1043, %v2778, %v2811
    %v2813 = vsel %vm1045, %v2782, %v2812
    %v2814 = vsel %vm1047, %v2786, %v2813
    %v2851 = vlaneseq
    %v2852 = vshrl.u32 %v2851, 7
    %v2853 = vsub.s32 %v1074, %v2852
    %v2854 = vrot.slane %v2533, %v2853
    %v2855 = vlaneseq
    %v2856 = vshrl.u32 %v2855, 7
    %v2857 = vsub.s32 %v1074, %v2856
    %v2858 = vrot.slane %v2536, %v2857
    %v2859 = vlaneseq
    %v2860 = vshrl.u32 %v2859, 7
    %v2861 = vsub.s32 %v1074, %v2860
    %v2862 = vrot.slane %v2539, %v2861
    %v2863 = vlaneseq
    %v2864 = vshrl.u32 %v2863, 7
    %v2865 = vsub.s32 %v1074, %v2864
    %v2866 = vrot.slane %v2542, %v2865
    %v2867 = vlaneseq
    %v2868 = vshrl.u32 %v2867, 7
    %v2869 = vsub.s32 %v1074, %v2868
    %v2870 = vrot.slane %v2545, %v2869
    %v2871 = vlaneseq
    %v2872 = vshrl.u32 %v2871, 7
    %v2873 = vsub.s32 %v1074, %v2872
    %v2874 = vrot.slane %v2548, %v2873
    %v2875 = vlaneseq
    %v2876 = vshrl.u32 %v2875, 7
    %v2877 = vsub.s32 %v1074, %v2876
    %v2878 = vrot.slane %v2551, %v2877
    %v2879 = vlaneseq
    %v2880 = vshrl.u32 %v2879, 7
    %v2881 = vsub.s32 %v1074, %v2880
    %v2882 = vrot.slane %v2554, %v2881
    %v2883 = vlaneseq
    %v2884 = vshrl.u32 %v2883, 7
    %v2885 = vsub.s32 %v1074, %v2884
    %v2886 = vrot.slane %v2557, %v2885
    %v2887 = vlaneseq
    %v2888 = vshrl.u32 %v2887, 7
    %v2889 = vsub.s32 %v1074, %v2888
    %v2890 = vrot.slane %v2560, %v2889
    %v2891 = vlaneseq
    %v2892 = vshrl.u32 %v2891, 7
    %v2893 = vsub.s32 %v1074, %v2892
    %v2894 = vrot.slane %v2563, %v2893
    %v2895 = vlaneseq
    %v2896 = vshrl.u32 %v2895, 7
    %v2897 = vsub.s32 %v1074, %v2896
    %v2898 = vrot.slane %v2566, %v2897
    %v2899 = vlaneseq
    %v2900 = vshrl.u32 %v2899, 7
    %v2901 = vsub.s32 %v1074, %v2900
    %v2902 = vrot.slane %v2569, %v2901
    %v2903 = vlaneseq
    %v2904 = vshrl.u32 %v2903, 7
    %v2905 = vsub.s32 %v1074, %v2904
    %v2906 = vrot.slane %v2572, %v2905
    %v2907 = vlaneseq
    %v2908 = vshrl.u32 %v2907, 7
    %v2909 = vsub.s32 %v1074, %v2908
    %v2910 = vrot.slane %v2575, %v2909
    %v2911 = vlaneseq
    %v2912 = vshrl.u32 %v2911, 7
    %v2913 = vsub.s32 %v1074, %v2912
    %v2914 = vrot.slane %v2578, %v2913
    %v2915 = vlaneseq
    %v2916 = vshrl.u32 %v2915, 7
    %v2917 = vsub.s32 %v1074, %v2916
    %v2918 = vrot.slane %v2581, %v2917
    %v2919 = vlaneseq
    %v2920 = vshrl.u32 %v2919, 7
    %v2921 = vsub.s32 %v1074, %v2920
    %v2922 = vrot.slane %v2584, %v2921
    %v2923 = vlaneseq
    %v2924 = vshrl.u32 %v2923, 7
    %v2925 = vsub.s32 %v1074, %v2924
    %v2926 = vrot.slane %v2587, %v2925
    %v2927 = vlaneseq
    %v2928 = vshrl.u32 %v2927, 7
    %v2929 = vsub.s32 %v1074, %v2928
    %v2930 = vrot.slane %v2590, %v2929
    %v2931 = vlaneseq
    %v2932 = vshrl.u32 %v2931, 7
    %v2933 = vsub.s32 %v1074, %v2932
    %v2934 = vrot.slane %v2593, %v2933
    %v2935 = vlaneseq
    %v2936 = vshrl.u32 %v2935, 7
    %v2937 = vsub.s32 %v1074, %v2936
    %v2938 = vrot.slane %v2596, %v2937
    %v2939 = vlaneseq
    %v2940 = vshrl.u32 %v2939, 7
    %v2941 = vsub.s32 %v1074, %v2940
    %v2942 = vrot.slane %v2599, %v2941
    %v2943 = vlaneseq
    %v2944 = vshrl.u32 %v2943, 7
    %v2945 = vsub.s32 %v1074, %v2944
    %v2946 = vrot.slane %v2602, %v2945
    %v2947 = vlaneseq
    %v2948 = vshrl.u32 %v2947, 7
    %v2949 = vsub.s32 %v1074, %v2948
    %v2950 = vrot.slane %v2605, %v2949
    %v2951 = vlaneseq
    %v2952 = vshrl.u32 %v2951, 7
    %v2953 = vsub.s32 %v1074, %v2952
    %v2954 = vrot.slane %v2608, %v2953
    %v2955 = vlaneseq
    %v2956 = vshrl.u32 %v2955, 7
    %v2957 = vsub.s32 %v1074, %v2956
    %v2958 = vrot.slane %v2611, %v2957
    %v2959 = vlaneseq
    %v2960 = vshrl.u32 %v2959, 7
    %v2961 = vsub.s32 %v1074, %v2960
    %v2962 = vrot.slane %v2614, %v2961
    %v2963 = vlaneseq
    %v2964 = vshrl.u32 %v2963, 7
    %v2965 = vsub.s32 %v1074, %v2964
    %v2966 = vrot.slane %v2617, %v2965
    %v2967 = vlaneseq
    %v2968 = vshrl.u32 %v2967, 7
    %v2969 = vsub.s32 %v1074, %v2968
    %v2970 = vrot.slane %v2620, %v2969
    %v2971 = vlaneseq
    %v2972 = vshrl.u32 %v2971, 7
    %v2973 = vsub.s32 %v1074, %v2972
    %v2974 = vrot.slane %v2623, %v2973
    %v2975 = vlaneseq
    %v2976 = vshrl.u32 %v2975, 7
    %v2977 = vsub.s32 %v1074, %v2976
    %v2978 = vrot.slane %v2626, %v2977
    %v2979 = vsel %vm1035, %v2858, %v2854
    %v2980 = vsel %vm1037, %v2862, %v2979
    %v2981 = vsel %vm1039, %v2866, %v2980
    %v2982 = vsel %vm1041, %v2870, %v2981
    %v2983 = vsel %vm1043, %v2874, %v2982
    %v2984 = vsel %vm1045, %v2878, %v2983
    %v2985 = vsel %vm1047, %v2882, %v2984
    %v2986 = vsel %vm1035, %v2890, %v2886
    %v2987 = vsel %vm1037, %v2894, %v2986
    %v2988 = vsel %vm1039, %v2898, %v2987
    %v2989 = vsel %vm1041, %v2902, %v2988
    %v2990 = vsel %vm1043, %v2906, %v2989
    %v2991 = vsel %vm1045, %v2910, %v2990
    %v2992 = vsel %vm1047, %v2914, %v2991
    %v2993 = vsel %vm1035, %v2922, %v2918
    %v2994 = vsel %vm1037, %v2926, %v2993
    %v2995 = vsel %vm1039, %v2930, %v2994
    %v2996 = vsel %vm1041, %v2934, %v2995
    %v2997 = vsel %vm1043, %v2938, %v2996
    %v2998 = vsel %vm1045, %v2942, %v2997
    %v2999 = vsel %vm1047, %v2946, %v2998
    %v3000 = vsel %vm1035, %v2954, %v2950
    %v3001 = vsel %vm1037, %v2958, %v3000
    %v3002 = vsel %vm1039, %v2962, %v3001
    %v3003 = vsel %vm1041, %v2966, %v3002
    %v3004 = vsel %vm1043, %v2970, %v3003
    %v3005 = vsel %vm1045, %v2974, %v3004
    %v3006 = vsel %vm1047, %v2978, %v3005
    %v3011 = vsel %vm239, %v2793, %v2985
    %v3012 = vsel %vm239, %v2800, %v2992
    %v3013 = vsel %vm239, %v2807, %v2999
    %v3014 = vsel %vm239, %v2814, %v3006
    %v3015 = vld [vmem:[#allocation14] sm:$0xff]
    %v3016 = vld [vmem:[#allocation14 + $0x8] sm:$0xff]
    %v3017 = vld [vmem:[#allocation14 + $0x10] sm:$0xff]
    %v3018 = vld [vmem:[#allocation14 + $0x18] sm:$0xff]
    %v3019 = vld [vmem:[#allocation14 + $0x20] sm:$0xff]
    %v3020 = vld [vmem:[#allocation14 + $0x28] sm:$0xff]
    %v3021 = vld [vmem:[#allocation14 + $0x30] sm:$0xff]
    %v3022 = vld [vmem:[#allocation14 + $0x38] sm:$0xff]
    %v3023 = vmul.f32 %v3011, %v3015
    %v3024 = vmul.f32 %v3012, %v3016
    %v3025 = vmul.f32 %v3011, %v3017
    %v3026 = vmul.f32 %v3012, %v3018
    %v3027 = vmul.f32 %v3011, %v3019
    %v3028 = vmul.f32 %v3012, %v3020
    %v3029 = vmul.f32 %v3011, %v3021
    %v3030 = vmul.f32 %v3012, %v3022
    %v3031 = vsel %vm1739, %v3023, 0.0
    %3032 = vadd.xlane.f32.xlu0 %v3031
    %v3033 = vpop.xlane.xlu0 %3032
    %v3034 = vsel %vm1739, %v3024, 0.0
    %3035 = vadd.xlane.f32.xlu0 %v3034
    %v3036 = vpop.xlane.xlu0 %3035
    %v3037 = vsel %vm1739, %v3025, 0.0
    %3038 = vadd.xlane.f32.xlu0 %v3037
    %v3039 = vpop.xlane.xlu0 %3038
    %v3040 = vsel %vm1739, %v3026, 0.0
    %3041 = vadd.xlane.f32.xlu0 %v3040
    %v3042 = vpop.xlane.xlu0 %3041
    %v3043 = vsel %vm1739, %v3027, 0.0
    %3044 = vadd.xlane.f32.xlu0 %v3043
    %v3045 = vpop.xlane.xlu0 %3044
    %v3046 = vsel %vm1739, %v3028, 0.0
    %3047 = vadd.xlane.f32.xlu0 %v3046
    %v3048 = vpop.xlane.xlu0 %3047
    %v3049 = vsel %vm1739, %v3029, 0.0
    %3050 = vadd.xlane.f32.xlu0 %v3049
    %v3051 = vpop.xlane.xlu0 %3050
    %v3052 = vsel %vm1739, %v3030, 0.0
    %3053 = vadd.xlane.f32.xlu0 %v3052
    %v3054 = vpop.xlane.xlu0 %3053
    %v3063 = vlaneseq
    %v3064 = vshrl.u32 %v3063, 7
    %v3065 = vsub.s32 %v970, %v3064
    %v3066 = vrot.slane %v3033, %v3065
    %v3067 = vlaneseq
    %v3068 = vshrl.u32 %v3067, 7
    %v3069 = vsub.s32 %v1074, %v3068
    %v3070 = vrot.slane %v3036, %v3069
    %vm3071 = vcmask 130112
    %v3072 = vsel %vm3071, %v3070, %v3066
    %v3073 = vlaneseq
    %v3074 = vshrl.u32 %v3073, 7
    %v3075 = vsub.s32 %v970, %v3074
    %v3076 = vrot.slane %v3039, %v3075
    %v3077 = vlaneseq
    %v3078 = vshrl.u32 %v3077, 7
    %v3079 = vsub.s32 %v1074, %v3078
    %v3080 = vrot.slane %v3042, %v3079
    %v3081 = vsel %vm3071, %v3080, %v3076
    %v3082 = vlaneseq
    %v3083 = vshrl.u32 %v3082, 7
    %v3084 = vsub.s32 %v970, %v3083
    %v3085 = vrot.slane %v3045, %v3084
    %v3086 = vlaneseq
    %v3087 = vshrl.u32 %v3086, 7
    %v3088 = vsub.s32 %v1074, %v3087
    %v3089 = vrot.slane %v3048, %v3088
    %v3090 = vsel %vm3071, %v3089, %v3085
    %v3091 = vlaneseq
    %v3092 = vshrl.u32 %v3091, 7
    %v3093 = vsub.s32 %v970, %v3092
    %v3094 = vrot.slane %v3051, %v3093
    %v3095 = vlaneseq
    %v3096 = vshrl.u32 %v3095, 7
    %v3097 = vsub.s32 %v1074, %v3096
    %v3098 = vrot.slane %v3054, %v3097
    %v3099 = vsel %vm3071, %v3098, %v3094
    %v3100 = vsel %vm1035, %v3081, %v3072
    %v3101 = vsel %vm1037, %v3090, %v3100
    %v3102 = vsel %vm1039, %v3099, %v3101
    %vm3104 = vcmask 125952
    %v3105 = vsel %vm3104, %v3102, 0.0
    %3106 = vadd.xlane.f32.xlu0 %v3105
    %v3107 = vpop.xlane.xlu0 %3106
    %v3108 = vmul.f32 %v3013, %v3015
    %v3109 = vmul.f32 %v3014, %v3016
    %v3110 = vmul.f32 %v3013, %v3017
    %v3111 = vmul.f32 %v3014, %v3018
    %v3112 = vmul.f32 %v3013, %v3019
    %v3113 = vmul.f32 %v3014, %v3020
    %v3114 = vmul.f32 %v3013, %v3021
    %v3115 = vmul.f32 %v3014, %v3022
    %v3116 = vsel %vm1739, %v3108, 0.0
    %3117 = vadd.xlane.f32.xlu0 %v3116
    %v3118 = vpop.xlane.xlu0 %3117
    %v3119 = vsel %vm1739, %v3109, 0.0
    %3120 = vadd.xlane.f32.xlu0 %v3119
    %v3121 = vpop.xlane.xlu0 %3120
    %v3122 = vsel %vm1739, %v3110, 0.0
    %3123 = vadd.xlane.f32.xlu0 %v3122
    %v3124 = vpop.xlane.xlu0 %3123
    %v3125 = vsel %vm1739, %v3111, 0.0
    %3126 = vadd.xlane.f32.xlu0 %v3125
    %v3127 = vpop.xlane.xlu0 %3126
    %v3128 = vsel %vm1739, %v3112, 0.0
    %3129 = vadd.xlane.f32.xlu0 %v3128
    %v3130 = vpop.xlane.xlu0 %3129
    %v3131 = vsel %vm1739, %v3113, 0.0
    %3132 = vadd.xlane.f32.xlu0 %v3131
    %v3133 = vpop.xlane.xlu0 %3132
    %v3134 = vsel %vm1739, %v3114, 0.0
    %3135 = vadd.xlane.f32.xlu0 %v3134
    %v3136 = vpop.xlane.xlu0 %3135
    %v3137 = vsel %vm1739, %v3115, 0.0
    %3138 = vadd.xlane.f32.xlu0 %v3137
    %v3139 = vpop.xlane.xlu0 %3138
    %v3148 = vlaneseq
    %v3149 = vshrl.u32 %v3148, 7
    %v3150 = vsub.s32 %v970, %v3149
    %v3151 = vrot.slane %v3118, %v3150
    %v3152 = vlaneseq
    %v3153 = vshrl.u32 %v3152, 7
    %v3154 = vsub.s32 %v1074, %v3153
    %v3155 = vrot.slane %v3121, %v3154
    %v3156 = vsel %vm3071, %v3155, %v3151
    %v3157 = vlaneseq
    %v3158 = vshrl.u32 %v3157, 7
    %v3159 = vsub.s32 %v970, %v3158
    %v3160 = vrot.slane %v3124, %v3159
    %v3161 = vlaneseq
    %v3162 = vshrl.u32 %v3161, 7
    %v3163 = vsub.s32 %v1074, %v3162
    %v3164 = vrot.slane %v3127, %v3163
    %v3165 = vsel %vm3071, %v3164, %v3160
    %v3166 = vlaneseq
    %v3167 = vshrl.u32 %v3166, 7
    %v3168 = vsub.s32 %v970, %v3167
    %v3169 = vrot.slane %v3130, %v3168
    %v3170 = vlaneseq
    %v3171 = vshrl.u32 %v3170, 7
    %v3172 = vsub.s32 %v1074, %v3171
    %v3173 = vrot.slane %v3133, %v3172
    %v3174 = vsel %vm3071, %v3173, %v3169
    %v3175 = vlaneseq
    %v3176 = vshrl.u32 %v3175, 7
    %v3177 = vsub.s32 %v970, %v3176
    %v3178 = vrot.slane %v3136, %v3177
    %v3179 = vlaneseq
    %v3180 = vshrl.u32 %v3179, 7
    %v3181 = vsub.s32 %v1074, %v3180
    %v3182 = vrot.slane %v3139, %v3181
    %v3183 = vsel %vm3071, %v3182, %v3178
    %v3184 = vsel %vm1035, %v3165, %v3156
    %v3185 = vsel %vm1037, %v3174, %v3184
    %v3186 = vsel %vm1039, %v3183, %v3185
    %v3188 = vsel %vm3104, %v3186, 0.0
    %3189 = vadd.xlane.f32.xlu0 %v3188
    %v3190 = vpop.xlane.xlu0 %3189
    %v3192 = vlaneseq
    %v3193 = vshrl.u32 %v3192, 7
    %v3194 = vsub.s32 %v970, %v3193
    %v3195 = vrot.slane %v3107, %v3194
    %v3198 = vlaneseq
    %v3199 = vshrl.u32 %v3198, 7
    %v3200 = vsub.s32 %v970, %v3199
    %v3201 = vrot.slane %v3190, %v3200
    %vm3203 = vcmask 1040384
    %v3204 = vsel %vm3203, %v3195, %v3201
    %v3205 = vld [vmem:[%s8] sm:$0x1]
    %v3207 = vlaneseq
    %v3208 = vshrl.u32 %v3207, 7
    %v3209 = vsub.s32 0, %v3208
    %v3210 = vrot.slane %v3205, %v3209
    %v3212 = vadd.f32 %v3204, %v3210
    %vm3213 = vcmask 25600
    %3214 = vst.msk [vmem:[#allocation16] sm:$0x3] %vm3213, %v3212
    // Predicated region
    $region70: #{tpu_custom_call.1} parent=1 // pred_check
      _
    $region71: #{tpu_custom_call.1} parent=1 // pred_check_branch
      %3216 = sbr.rel (0) target = $region73
    $region72: #{tpu_custom_call.1} parent=1 // pred_region
      %s3218 = ssub.s32 32, 32
      %3219 = vsyncadd [#allocation4], %s3218
      %s3221 = sshll.u32 [#allocation16], 4
      %s3222 = int_to_ptr.vmem [resolvable:$true] %s3221
      %3224 = dma.vmem_to_hbm [thread:$0]  %s3222, 32, %s9, [#allocation4]
    $region73: #{tpu_custom_call.1} parent=1 // pred_fallthru
      _
    // Predicated region
    $region74: #{tpu_custom_call.1} parent=1 // pred_check
      _
    $region75: #{tpu_custom_call.1} parent=1 // pred_check_branch
      %3226 = sbr.rel (0) target = $region77
    $region76: #{tpu_custom_call.1} parent=1 // pred_region
      %3227 = dma.done [#allocation4], 32
    $region77: #{tpu_custom_call.1} parent=1 // pred_fallthru
      _
    %3228 = vsyncpa [#allocation3], 1
    %3229 = vsyncpa [#allocation6], 1
    %3230 = vsyncpa [#allocation9], 1
    %3231 = vsyncpa [#allocation12], 1
    %3232 = vsyncpa [#allocation15], 1
    %3233 = vsyncpa [#allocation4], 1

</llo_original>
